<compile_context>
chip_gen: v6e
topology: v6e:2x2x1
jax: 0.10.0
libtpu: 0.0.40
codegen_flags: <defaults>
</compile_context>

<pallas_src>
import jax
import jax.numpy as jnp
from jax.experimental import pallas as pl
from jax.experimental.pallas import tpu as pltpu


def _conv_bn_kernel(xp_ref, w_ref, bias_ref, o_ref):
    # xp_ref:   (1, H+2, Wp, Cin)   bf16 zero-padded NHWC input, one batch element
    # w_ref:    (3, 3, Cin, TCout)  bf16 conv weights (HWIO), BN scale pre-folded
    # bias_ref: (1, TCout)          f32 folded BN bias = beta - mean * scale
    # o_ref:    (1, TH, W, TCout)   one (row tile, Cout tile) of the output
    TH = o_ref.shape[1]
    W = o_ref.shape[2]
    TCout = o_ref.shape[3]
    Cin = xp_ref.shape[3]
    M = TH * W

    ht = pl.program_id(1)
    row0 = pl.multiple_of(ht * TH, TH)

    # One aligned load of the (TH+2)-row window for this output row tile; widen to f32 so the
    # nine shifted tap views below are plain 32-bit sublane ops (no packed-bf16 relayouts).
    win = xp_ref[0, pl.ds(row0, TH + 2), :, :].astype(jnp.float32)   # (TH+2, Wp, Cin)

    acc = jnp.zeros((M, TCout), jnp.float32)
    # 3x3 conv as 9 shifted (M, Cin) x (Cin, TCout) bf16 matmuls, f32 accumulation.
    for dy in range(3):
        for dx in range(3):
            tap = win[dy:dy + TH, dx:dx + W, :]              # value view; dx realign on XLU/VPU
            tap = tap.reshape(M, Cin).astype(jnp.bfloat16)   # free reshape (W % 8 == 0) + pack
            acc = acc + jnp.dot(tap, w_ref[dy, dx],
                                preferred_element_type=jnp.float32)

    y = acc + bias_ref[...]                                  # fused BatchNorm (eval) bias
    o_ref[...] = y.reshape(1, TH, W, TCout).astype(o_ref.dtype)


def conv_bn2d_forward(x_nchw, w_oihw, gamma, beta, running_mean, running_var,
                      eps=1e-5):
    """ConvBn2d forward (inference).  x_nchw: (N, Cin, H, W) -> (N, Cout, H, W)."""
    N, Cin, H, W = x_nchw.shape
    Cout = w_oihw.shape[0]

    # ---- fold BatchNorm (running stats) into the conv ----
    scale = gamma / jnp.sqrt(running_var + eps)                   # (Cout,)
    bias = beta - running_mean * scale                            # (Cout,)
    w_folded = w_oihw * scale[:, None, None, None]                # exact: conv is linear

    # ---- TPU-friendly padded sizes / tiles ----
    LANE = 128
    Coutp = ((Cout + LANE - 1) // LANE) * LANE                    # lane-dense output stores
    TCout = 256 if Coutp % 256 == 0 else 128                      # Cout tile (256 fits v6e/v7x MXU)
    Wp = ((W + 2 + 7) // 8) * 8                                   # conv pad + sublane-multiple width
    TH = 8 if H % 8 == 0 else H                                   # output row tile (v7x parallelism,
                                                                  # keeps acc + window < vreg file)

    # NCHW -> NHWC, zero pad (1 row/col each side, extra zero cols on the right up to Wp),
    # cast activations to bf16 so their HBM->VMEM DMA moves half the bytes.
    x_nhwc = jnp.transpose(x_nchw, (0, 2, 3, 1))
    x_pad = jnp.pad(x_nhwc, ((0, 0), (1, 1), (1, Wp - W - 1), (0, 0))).astype(jnp.bfloat16)

    # OIHW -> HWIO, pad Cout -> Coutp, bf16 (MXU-native operands).
    w_hwio = jnp.transpose(w_folded, (2, 3, 1, 0))
    w_hwio = jnp.pad(w_hwio, ((0, 0), (0, 0), (0, 0), (0, Coutp - Cout))).astype(jnp.bfloat16)
    bias_p = jnp.pad(bias, (0, Coutp - Cout)).reshape(1, Coutp).astype(jnp.float32)

    grid = (N, H // TH, Coutp // TCout)

    cost = pl.CostEstimate(
        flops=2 * N * H * W * 9 * Cin * Coutp,
        transcendentals=0,
        bytes_accessed=(x_pad.size * 2 + w_hwio.size * 2 + bias_p.size * 4
                        + N * H * W * Coutp * 4),
    )

    out_nhwc = pl.pallas_call(
        _conv_bn_kernel,
        out_shape=jax.ShapeDtypeStruct((N, H, W, Coutp), x_nchw.dtype),
        grid_spec=pltpu.PrefetchScalarGridSpec(
            num_scalar_prefetch=0,
            grid=grid,
            in_specs=[
                # Full padded image per batch element: block index constant over (h, c), so the
                # pipeline does NOT re-DMA it across the inner grid axes.
                pl.BlockSpec((1, H + 2, Wp, Cin), lambda n, h, c: (n, 0, 0, 0)),
                # Weights / bias: constant over (n, h); only the Cout tile index changes.
                pl.BlockSpec((3, 3, Cin, TCout), lambda n, h, c: (0, 0, 0, c)),
                pl.BlockSpec((1, TCout), lambda n, h, c: (0, c)),
            ],
            out_specs=pl.BlockSpec((1, TH, W, TCout), lambda n, h, c: (n, h, 0, c)),
        ),
        compiler_params=pltpu.CompilerParams(
            dimension_semantics=("parallel", "parallel", "parallel")),
        cost_estimate=cost,
    )(x_pad, w_hwio, bias_p)

    # Drop Cout padding, NHWC -> NCHW to match the PyTorch convention.
    return jnp.transpose(out_nhwc[..., :Cout], (0, 3, 1, 2))


def _reference_forward(x_nchw, w_oihw, gamma, beta, running_mean, running_var,
                       eps=1e-5):
    """Pure-JAX reference (conv -> BN eval) for a correctness check."""
    y = jax.lax.conv_general_dilated(
        x_nchw.astype(jnp.float32), w_oihw.astype(jnp.float32),
        window_strides=(1, 1), padding=((1, 1), (1, 1)),
        dimension_numbers=("NCHW", "OIHW", "NCHW"))
    scale = (gamma / jnp.sqrt(running_var + eps)).reshape(1, -1, 1, 1)
    bias = (beta - running_mean * gamma / jnp.sqrt(running_var + eps)).reshape(1, -1, 1, 1)
    return y * scale + bias


if __name__ == "__main__":
    key = jax.random.PRNGKey(0)
    k_x, k_w, k_g, k_b, k_m, k_v = jax.random.split(key, 6)

    N, Cin, H, W = 2, 4, 16, 16
    Cout = 8

    x = jax.random.normal(k_x, (N, Cin, H, W), dtype=jnp.float32)
    # Conv2d weight (bias=False), OIHW.
    w = jax.random.normal(k_w, (Cout, Cin, 3, 3), dtype=jnp.float32) * 0.1
    # BatchNorm2d parameters (deterministic).
    gamma = 1.0 + 0.1 * jax.random.normal(k_g, (Cout,), dtype=jnp.float32)
    beta = 0.1 * jax.random.normal(k_b, (Cout,), dtype=jnp.float32)
    running_mean = 0.1 * jax.random.normal(k_m, (Cout,), dtype=jnp.float32)
    running_var = jnp.abs(1.0 + 0.1 * jax.random.normal(k_v, (Cout,), dtype=jnp.float32))

    out = conv_bn2d_forward(x, w, gamma, beta, running_mean, running_var)
    out = jax.block_until_ready(out)

    ref = _reference_forward(x, w, gamma, beta, running_mean, running_var)
    assert out.shape == (N, Cout, H, W)
    # bf16 MXU operands vs f32 reference -> relaxed tolerance (per review guidance).
    max_err = jnp.max(jnp.abs(out - ref))
    assert jnp.allclose(out, ref, atol=5e-2, rtol=5e-2), f"mismatch vs reference, max abs err={max_err}"

    print("KERNEL_OK")
</pallas_src>

<mosaic_0001>
module attributes {stable_mosaic.version = 11 : i64} {
  func.func @_conv_bn_kernel(%arg0: i32, %arg1: i32, %arg2: i32, %arg3: memref<1x18x24x4xbf16, #tpu.memory_space<vmem>>, %arg4: memref<3x3x4x128xbf16, #tpu.memory_space<vmem>>, %arg5: memref<1x128xf32, #tpu.memory_space<vmem>>, %arg6: memref<1x8x16x128xf32, #tpu.memory_space<vmem>>) attributes {dimension_semantics = [#tpu.dimension_semantics<parallel>, #tpu.dimension_semantics<parallel>, #tpu.dimension_semantics<parallel>], iteration_bounds = array<i64: 2, 2, 1>, scalar_prefetch = 0 : i64, scratch_operands = 0 : i64, tpu.core_type = #tpu.core_type<tc>, window_params = [{transform_indices = @transform_0, window_bounds = array<i64: 1, 18, 24, 4>}, {transform_indices = @transform_1, window_bounds = array<i64: 3, 3, 4, 128>}, {transform_indices = @transform_2, window_bounds = array<i64: 1, 128>}, {transform_indices = @transform_3, window_bounds = array<i64: 1, 8, 16, 128>}]} {
    %c8_i32 = arith.constant 8 : i32
    %0 = arith.muli %arg1, %c8_i32 : i32
    %1 = tpu.assume_multiple %0, 8 : i32
    %c0 = arith.constant 0 : index
    %2 = arith.index_cast %1 : i32 to index
    %c0_0 = arith.constant 0 : index
    %c0_1 = arith.constant 0 : index
    %3 = vector.load %arg3[%c0, %2, %c0_0, %c0_1] : memref<1x18x24x4xbf16, #tpu.memory_space<vmem>>, vector<1x10x24x4xbf16>
    %4 = vector.shape_cast %3 : vector<1x10x24x4xbf16> to vector<10x24x4xbf16>
    %5 = arith.extf %4 : vector<10x24x4xbf16> to vector<10x24x4xf32>
    %cst = arith.constant 0.000000e+00 : f32
    %6 = vector.broadcast %cst : f32 to vector<128x128xf32>
    %7 = vector.extract_strided_slice %5 {offsets = [0, 0, 0], sizes = [8, 16, 4], strides = [1, 1, 1]} : vector<10x24x4xf32> to vector<8x16x4xf32>
    %8 = vector.shape_cast %7 : vector<8x16x4xf32> to vector<128x4xf32>
    %9 = arith.truncf %8 : vector<128x4xf32> to vector<128x4xbf16>
    %c0_2 = arith.constant 0 : index
    %c0_3 = arith.constant 0 : index
    %c0_4 = arith.constant 0 : index
    %c0_5 = arith.constant 0 : index
    %10 = vector.load %arg4[%c0_2, %c0_3, %c0_4, %c0_5] : memref<3x3x4x128xbf16, #tpu.memory_space<vmem>>, vector<1x1x4x128xbf16>
    %11 = vector.shape_cast %10 : vector<1x1x4x128xbf16> to vector<4x128xbf16>
    %cst_6 = arith.constant dense<0.000000e+00> : vector<128x128xf32>
    %12 = tpu.matmul %9, %11, %cst_6 {dimension_numbers = #tpu.dot_dimension_numbers<[1], [0], [0], [1], [0, 0, 1, 1], [], []>} : vector<128x4xbf16>, vector<4x128xbf16>, vector<128x128xf32> -> vector<128x128xf32>
    %13 = arith.addf %6, %12 : vector<128x128xf32>
    %14 = vector.extract_strided_slice %5 {offsets = [0, 1, 0], sizes = [8, 16, 4], strides = [1, 1, 1]} : vector<10x24x4xf32> to vector<8x16x4xf32>
    %15 = vector.shape_cast %14 : vector<8x16x4xf32> to vector<128x4xf32>
    %16 = arith.truncf %15 : vector<128x4xf32> to vector<128x4xbf16>
    %c0_7 = arith.constant 0 : index
    %c1 = arith.constant 1 : index
    %c0_8 = arith.constant 0 : index
    %c0_9 = arith.constant 0 : index
    %17 = vector.load %arg4[%c0_7, %c1, %c0_8, %c0_9] : memref<3x3x4x128xbf16, #tpu.memory_space<vmem>>, vector<1x1x4x128xbf16>
    %18 = vector.shape_cast %17 : vector<1x1x4x128xbf16> to vector<4x128xbf16>
    %cst_10 = arith.constant dense<0.000000e+00> : vector<128x128xf32>
    %19 = tpu.matmul %16, %18, %cst_10 {dimension_numbers = #tpu.dot_dimension_numbers<[1], [0], [0], [1], [0, 0, 1, 1], [], []>} : vector<128x4xbf16>, vector<4x128xbf16>, vector<128x128xf32> -> vector<128x128xf32>
    %20 = arith.addf %13, %19 : vector<128x128xf32>
    %21 = vector.extract_strided_slice %5 {offsets = [0, 2, 0], sizes = [8, 16, 4], strides = [1, 1, 1]} : vector<10x24x4xf32> to vector<8x16x4xf32>
    %22 = vector.shape_cast %21 : vector<8x16x4xf32> to vector<128x4xf32>
    %23 = arith.truncf %22 : vector<128x4xf32> to vector<128x4xbf16>
    %c0_11 = arith.constant 0 : index
    %c2 = arith.constant 2 : index
    %c0_12 = arith.constant 0 : index
    %c0_13 = arith.constant 0 : index
    %24 = vector.load %arg4[%c0_11, %c2, %c0_12, %c0_13] : memref<3x3x4x128xbf16, #tpu.memory_space<vmem>>, vector<1x1x4x128xbf16>
    %25 = vector.shape_cast %24 : vector<1x1x4x128xbf16> to vector<4x128xbf16>
    %cst_14 = arith.constant dense<0.000000e+00> : vector<128x128xf32>
    %26 = tpu.matmul %23, %25, %cst_14 {dimension_numbers = #tpu.dot_dimension_numbers<[1], [0], [0], [1], [0, 0, 1, 1], [], []>} : vector<128x4xbf16>, vector<4x128xbf16>, vector<128x128xf32> -> vector<128x128xf32>
    %27 = arith.addf %20, %26 : vector<128x128xf32>
    %28 = vector.extract_strided_slice %5 {offsets = [1, 0, 0], sizes = [8, 16, 4], strides = [1, 1, 1]} : vector<10x24x4xf32> to vector<8x16x4xf32>
    %29 = vector.shape_cast %28 : vector<8x16x4xf32> to vector<128x4xf32>
    %30 = arith.truncf %29 : vector<128x4xf32> to vector<128x4xbf16>
    %c1_15 = arith.constant 1 : index
    %c0_16 = arith.constant 0 : index
    %c0_17 = arith.constant 0 : index
    %c0_18 = arith.constant 0 : index
    %31 = vector.load %arg4[%c1_15, %c0_16, %c0_17, %c0_18] : memref<3x3x4x128xbf16, #tpu.memory_space<vmem>>, vector<1x1x4x128xbf16>
    %32 = vector.shape_cast %31 : vector<1x1x4x128xbf16> to vector<4x128xbf16>
    %cst_19 = arith.constant dense<0.000000e+00> : vector<128x128xf32>
    %33 = tpu.matmul %30, %32, %cst_19 {dimension_numbers = #tpu.dot_dimension_numbers<[1], [0], [0], [1], [0, 0, 1, 1], [], []>} : vector<128x4xbf16>, vector<4x128xbf16>, vector<128x128xf32> -> vector<128x128xf32>
    %34 = arith.addf %27, %33 : vector<128x128xf32>
    %35 = vector.extract_strided_slice %5 {offsets = [1, 1, 0], sizes = [8, 16, 4], strides = [1, 1, 1]} : vector<10x24x4xf32> to vector<8x16x4xf32>
    %36 = vector.shape_cast %35 : vector<8x16x4xf32> to vector<128x4xf32>
    %37 = arith.truncf %36 : vector<128x4xf32> to vector<128x4xbf16>
    %c1_20 = arith.constant 1 : index
    %c1_21 = arith.constant 1 : index
    %c0_22 = arith.constant 0 : index
    %c0_23 = arith.constant 0 : index
    %38 = vector.load %arg4[%c1_20, %c1_21, %c0_22, %c0_23] : memref<3x3x4x128xbf16, #tpu.memory_space<vmem>>, vector<1x1x4x128xbf16>
    %39 = vector.shape_cast %38 : vector<1x1x4x128xbf16> to vector<4x128xbf16>
    %cst_24 = arith.constant dense<0.000000e+00> : vector<128x128xf32>
    %40 = tpu.matmul %37, %39, %cst_24 {dimension_numbers = #tpu.dot_dimension_numbers<[1], [0], [0], [1], [0, 0, 1, 1], [], []>} : vector<128x4xbf16>, vector<4x128xbf16>, vector<128x128xf32> -> vector<128x128xf32>
    %41 = arith.addf %34, %40 : vector<128x128xf32>
    %42 = vector.extract_strided_slice %5 {offsets = [1, 2, 0], sizes = [8, 16, 4], strides = [1, 1, 1]} : vector<10x24x4xf32> to vector<8x16x4xf32>
    %43 = vector.shape_cast %42 : vector<8x16x4xf32> to vector<128x4xf32>
    %44 = arith.truncf %43 : vector<128x4xf32> to vector<128x4xbf16>
    %c1_25 = arith.constant 1 : index
    %c2_26 = arith.constant 2 : index
    %c0_27 = arith.constant 0 : index
    %c0_28 = arith.constant 0 : index
    %45 = vector.load %arg4[%c1_25, %c2_26, %c0_27, %c0_28] : memref<3x3x4x128xbf16, #tpu.memory_space<vmem>>, vector<1x1x4x128xbf16>
    %46 = vector.shape_cast %45 : vector<1x1x4x128xbf16> to vector<4x128xbf16>
    %cst_29 = arith.constant dense<0.000000e+00> : vector<128x128xf32>
    %47 = tpu.matmul %44, %46, %cst_29 {dimension_numbers = #tpu.dot_dimension_numbers<[1], [0], [0], [1], [0, 0, 1, 1], [], []>} : vector<128x4xbf16>, vector<4x128xbf16>, vector<128x128xf32> -> vector<128x128xf32>
    %48 = arith.addf %41, %47 : vector<128x128xf32>
    %49 = vector.extract_strided_slice %5 {offsets = [2, 0, 0], sizes = [8, 16, 4], strides = [1, 1, 1]} : vector<10x24x4xf32> to vector<8x16x4xf32>
    %50 = vector.shape_cast %49 : vector<8x16x4xf32> to vector<128x4xf32>
    %51 = arith.truncf %50 : vector<128x4xf32> to vector<128x4xbf16>
    %c2_30 = arith.constant 2 : index
    %c0_31 = arith.constant 0 : index
    %c0_32 = arith.constant 0 : index
    %c0_33 = arith.constant 0 : index
    %52 = vector.load %arg4[%c2_30, %c0_31, %c0_32, %c0_33] : memref<3x3x4x128xbf16, #tpu.memory_space<vmem>>, vector<1x1x4x128xbf16>
    %53 = vector.shape_cast %52 : vector<1x1x4x128xbf16> to vector<4x128xbf16>
    %cst_34 = arith.constant dense<0.000000e+00> : vector<128x128xf32>
    %54 = tpu.matmul %51, %53, %cst_34 {dimension_numbers = #tpu.dot_dimension_numbers<[1], [0], [0], [1], [0, 0, 1, 1], [], []>} : vector<128x4xbf16>, vector<4x128xbf16>, vector<128x128xf32> -> vector<128x128xf32>
    %55 = arith.addf %48, %54 : vector<128x128xf32>
    %56 = vector.extract_strided_slice %5 {offsets = [2, 1, 0], sizes = [8, 16, 4], strides = [1, 1, 1]} : vector<10x24x4xf32> to vector<8x16x4xf32>
    %57 = vector.shape_cast %56 : vector<8x16x4xf32> to vector<128x4xf32>
    %58 = arith.truncf %57 : vector<128x4xf32> to vector<128x4xbf16>
    %c2_35 = arith.constant 2 : index
    %c1_36 = arith.constant 1 : index
    %c0_37 = arith.constant 0 : index
    %c0_38 = arith.constant 0 : index
    %59 = vector.load %arg4[%c2_35, %c1_36, %c0_37, %c0_38] : memref<3x3x4x128xbf16, #tpu.memory_space<vmem>>, vector<1x1x4x128xbf16>
    %60 = vector.shape_cast %59 : vector<1x1x4x128xbf16> to vector<4x128xbf16>
    %cst_39 = arith.constant dense<0.000000e+00> : vector<128x128xf32>
    %61 = tpu.matmul %58, %60, %cst_39 {dimension_numbers = #tpu.dot_dimension_numbers<[1], [0], [0], [1], [0, 0, 1, 1], [], []>} : vector<128x4xbf16>, vector<4x128xbf16>, vector<128x128xf32> -> vector<128x128xf32>
    %62 = arith.addf %55, %61 : vector<128x128xf32>
    %63 = vector.extract_strided_slice %5 {offsets = [2, 2, 0], sizes = [8, 16, 4], strides = [1, 1, 1]} : vector<10x24x4xf32> to vector<8x16x4xf32>
    %64 = vector.shape_cast %63 : vector<8x16x4xf32> to vector<128x4xf32>
    %65 = arith.truncf %64 : vector<128x4xf32> to vector<128x4xbf16>
    %c2_40 = arith.constant 2 : index
    %c2_41 = arith.constant 2 : index
    %c0_42 = arith.constant 0 : index
    %c0_43 = arith.constant 0 : index
    %66 = vector.load %arg4[%c2_40, %c2_41, %c0_42, %c0_43] : memref<3x3x4x128xbf16, #tpu.memory_space<vmem>>, vector<1x1x4x128xbf16>
    %67 = vector.shape_cast %66 : vector<1x1x4x128xbf16> to vector<4x128xbf16>
    %cst_44 = arith.constant dense<0.000000e+00> : vector<128x128xf32>
    %68 = tpu.matmul %65, %67, %cst_44 {dimension_numbers = #tpu.dot_dimension_numbers<[1], [0], [0], [1], [0, 0, 1, 1], [], []>} : vector<128x4xbf16>, vector<4x128xbf16>, vector<128x128xf32> -> vector<128x128xf32>
    %69 = arith.addf %62, %68 : vector<128x128xf32>
    %c0_45 = arith.constant 0 : index
    %c0_46 = arith.constant 0 : index
    %70 = vector.load %arg5[%c0_45, %c0_46] : memref<1x128xf32, #tpu.memory_space<vmem>>, vector<1x128xf32>
    %71 = vector.broadcast %70 : vector<1x128xf32> to vector<128x128xf32>
    %72 = arith.addf %69, %71 : vector<128x128xf32>
    %73 = vector.shape_cast %72 : vector<128x128xf32> to vector<1x8x16x128xf32>
    %c0_47 = arith.constant 0 : index
    %c0_48 = arith.constant 0 : index
    %c0_49 = arith.constant 0 : index
    %c0_50 = arith.constant 0 : index
    %74 = vector.load %arg6[%c0_47, %c0_48, %c0_49, %c0_50] : memref<1x8x16x128xf32, #tpu.memory_space<vmem>>, vector<1x8x16x128xf32>
    tpu.vector_store %arg6[%c0_47, %c0_48, %c0_49, %c0_50], %73 {strides = array<i32>} : memref<1x8x16x128xf32, #tpu.memory_space<vmem>>, vector<1x8x16x128xf32>,
    return
  }
  func.func @transform_0(%arg0: i32, %arg1: i32, %arg2: i32) -> (i32, i32, i32, i32) {
    %c0_i32 = arith.constant 0 : i32
    %c0_i32_0 = arith.constant 0 : i32
    %c0_i32_1 = arith.constant 0 : i32
    %c0_i32_2 = arith.constant 0 : i32
    return %arg0, %c0_i32, %c0_i32_0, %c0_i32_1 : i32, i32, i32, i32
  }
  func.func @transform_1(%arg0: i32, %arg1: i32, %arg2: i32) -> (i32, i32, i32, i32) {
    %c0_i32 = arith.constant 0 : i32
    %c0_i32_0 = arith.constant 0 : i32
    %c0_i32_1 = arith.constant 0 : i32
    %c0_i32_2 = arith.constant 0 : i32
    return %c0_i32, %c0_i32_0, %c0_i32_1, %arg2 : i32, i32, i32, i32
  }
  func.func @transform_2(%arg0: i32, %arg1: i32, %arg2: i32) -> (i32, i32) {
    %c0_i32 = arith.constant 0 : i32
    %c0_i32_0 = arith.constant 0 : i32
    return %c0_i32, %arg2 : i32, i32
  }
  func.func @transform_3(%arg0: i32, %arg1: i32, %arg2: i32) -> (i32, i32, i32, i32) {
    %c0_i32 = arith.constant 0 : i32
    %c0_i32_0 = arith.constant 0 : i32
    return %arg0, %arg1, %c0_i32, %arg2 : i32, i32, i32, i32
  }
}

</mosaic_0001>

<llo_original>
// kernel: tpu_custom_call.1
$region0: #{tpu_custom_call.1}
  #allocation0 [shape = 'u32[]', space=smem, size = 0x4, offset = 0x4, fixed_abs, tag = 'smem constant byte address 0x4 - core index']
  #allocation1 [shape = 'u32[144,128]{1,0:T(1,128)}', space=vmem, size = 0x12000, scoped, tag = 'internal scratch']
  %s0 = inlined_call_operand.vmem [shape: bf16[2,18,24,4], index: 0, kind: input, shape index: {}]
  %s1 = inlined_call_operand.vmem [shape: bf16[3,3,4,128], index: 1, kind: input, shape index: {}]
  %s2 = inlined_call_operand.vmem [shape: f32[1,128], index: 2, kind: input, shape index: {}]
  %s3 = inlined_call_operand.hbm [shape: f32[2,16,16,128], index: 3, kind: output, shape index: {}]
  %s4 = sld [smem:[#allocation0]]
  $region45: #{tpu_custom_call.1} parent=0
    _
  %s6 = ssub.s32 1, %s4
  %s7 = scalar_select 0, %s6, %s4
  $region1: #{tpu_custom_call.1} parent=0
    #allocation2 [shape = 'u8[131072]{0}', space=vmem, size = 0x20000, scoped, tag = 'output window, operand 0']
    #allocation3 [shape = 's32[2]{0}', space=sflag, size = 0x8, scoped, tag = 'scoped memory for tpu_custom_call.1']
    %8 = vsyncpa [#allocation3], 0
    %s9 = scalar_lea.sflag [#allocation3], 1
    %10 = vsyncpa %s9, 0
    loop: start=0, step=1, limit=6
    $region2: #{tpu_custom_call.1} parent=1 // loop_pre_header
      _
    $region3: #{tpu_custom_call.1} parent=1 // loop_header
      %s12 = sphi 0, %s16
      %p13 = scmp.ge.s32.totalorder %s12, 6
      %s19 = sphi 0, %s38
      %s20 = sphi 0, %s34
      %s21 = sphi 0, %s30
      %s22 = sphi 0, %s19
      %s23 = sphi 0, %s20
      %s24 = sphi 0, %s21
      %s25 = sphi 0, %s22
      %s26 = sphi 0, %s23
      %s27 = sphi 0, %s24
      %s41 = sphi 0, %s43
      %s44 = sphi 0, %s41
      %s45 = sphi 0, %s44
      %s61 = sphi 0, %s45
      %s67 = sphi 0, %s69
      %s70 = sphi 0, %s67
      %s71 = sphi 0, %s70
      %s87 = sphi 0, %s71
      %s93 = sphi 0, %s95
      %s96 = sphi 0, %s93
      %s97 = sphi 0, %s96
      %s113 = sphi 0, %s97
      %s123 = sphi 0, %s125
      %s126 = sphi 0, %s123
      %s127 = sphi 0, %s126
      %s143 = sphi 0, %s127
    $region4: #{tpu_custom_call.1} parent=1 // loop_header_branch
      %15 = sbr.rel (%p13) target = $region8
    $region5: #{tpu_custom_call.1} parent=1 // loop_body
      %s17 = ssub.s32 %s12, 1
      %s18 = ssub.s32 %s12, 2
      %s28 = sadd.s32 1, %s21
      %p29 = scmp.ge.s32.totalorder %s28, 1
      %s30 = scalar_select %p29, 0, %s28
      %s31 = sadd.s32 1, %s20
      %s32 = scalar_select %p29, %s31, %s20
      %p33 = scmp.ge.s32.totalorder %s32, 2
      %s34 = scalar_select %p33, 0, %s32
      %s35 = sadd.s32 1, %s19
      %s36 = scalar_select %p33, %s35, %s19
      %p37 = scmp.ge.s32.totalorder %s36, 2
      %s38 = scalar_select %p37, 0, %s36
      %s39 = ssub.s32 %s19, %s38
      %p40 = scmp.eq.s32.totalorder %s39, 0
      %s42 = sadd.s32 %s41, 1
      %s43 = scalar_select %p40, %s41, %s42
      %p46 = pneg %p40
      %p47 = scmp.eq.s32.totalorder %s12, 3
      %p48 = por %p46, %p47
      %p49 = scmp.ne.s32.totalorder %s41, %s44
      %p50 = scmp.eq.s32.totalorder %s12, 0
      %p51 = por %p49, %p50
      %p52 = scmp.ne.s32.totalorder %s41, %s44
      %p53 = scmp.eq.s32.totalorder %s17, 3
      %p54 = por %p52, %p53
      %p55 = scmp.ne.s32.totalorder %s44, %s45
      %p56 = scmp.eq.s32.totalorder %s17, 0
      %p57 = por %p55, %p56
      %p58 = scmp.ne.s32.totalorder %s44, %s45
      %p59 = scmp.eq.s32.totalorder %s18, 3
      %p60 = por %p58, %p59
      %p62 = scmp.ne.s32.totalorder %s45, %s61
      %p63 = scmp.eq.s32.totalorder %s18, 0
      %p64 = por %p62, %p63
      %s65 = ssub.s32 %s21, %s30
      %p66 = scmp.eq.s32.totalorder %s65, 0
      %s68 = sadd.s32 %s67, 1
      %s69 = scalar_select %p66, %s67, %s68
      %p72 = pneg %p66
      %p73 = scmp.eq.s32.totalorder %s12, 3
      %p74 = por %p72, %p73
      %p75 = scmp.ne.s32.totalorder %s67, %s70
      %p76 = scmp.eq.s32.totalorder %s12, 0
      %p77 = por %p75, %p76
      %p78 = scmp.ne.s32.totalorder %s67, %s70
      %p79 = scmp.eq.s32.totalorder %s17, 3
      %p80 = por %p78, %p79
      %p81 = scmp.ne.s32.totalorder %s70, %s71
      %p82 = scmp.eq.s32.totalorder %s17, 0
      %p83 = por %p81, %p82
      %p84 = scmp.ne.s32.totalorder %s70, %s71
      %p85 = scmp.eq.s32.totalorder %s18, 3
      %p86 = por %p84, %p85
      %p88 = scmp.ne.s32.totalorder %s71, %s87
      %p89 = scmp.eq.s32.totalorder %s18, 0
      %p90 = por %p88, %p89
      %s91 = ssub.s32 %s21, %s30
      %p92 = scmp.eq.s32.totalorder %s91, 0
      %s94 = sadd.s32 %s93, 1
      %s95 = scalar_select %p92, %s93, %s94
      %p98 = pneg %p92
      %p99 = scmp.eq.s32.totalorder %s12, 3
      %p100 = por %p98, %p99
      %p101 = scmp.ne.s32.totalorder %s93, %s96
      %p102 = scmp.eq.s32.totalorder %s12, 0
      %p103 = por %p101, %p102
      %p104 = scmp.ne.s32.totalorder %s93, %s96
      %p105 = scmp.eq.s32.totalorder %s17, 3
      %p106 = por %p104, %p105
      %p107 = scmp.ne.s32.totalorder %s96, %s97
      %p108 = scmp.eq.s32.totalorder %s17, 0
      %p109 = por %p107, %p108
      %p110 = scmp.ne.s32.totalorder %s96, %s97
      %p111 = scmp.eq.s32.totalorder %s18, 3
      %p112 = por %p110, %p111
      %p114 = scmp.ne.s32.totalorder %s97, %s113
      %p115 = scmp.eq.s32.totalorder %s18, 0
      %p116 = por %p114, %p115
      %s117 = ssub.s32 %s19, %s38
      %s118 = ssub.s32 %s20, %s34
      %s119 = sor.u32 %s117, %s118
      %s120 = ssub.s32 %s21, %s30
      %s121 = sor.u32 %s119, %s120
      %p122 = scmp.eq.s32.totalorder %s121, 0
      %s124 = sadd.s32 %s123, 1
      %s125 = scalar_select %p122, %s123, %s124
      %p128 = pneg %p122
      %p129 = scmp.eq.s32.totalorder %s12, 3
      %p130 = por %p128, %p129
      %p131 = scmp.ne.s32.totalorder %s123, %s126
      %p132 = scmp.eq.s32.totalorder %s12, 0
      %p133 = por %p131, %p132
      %p134 = scmp.ne.s32.totalorder %s123, %s126
      %p135 = scmp.eq.s32.totalorder %s17, 3
      %p136 = por %p134, %p135
      %p137 = scmp.ne.s32.totalorder %s126, %s127
      %p138 = scmp.eq.s32.totalorder %s17, 0
      %p139 = por %p137, %p138
      %p140 = scmp.ne.s32.totalorder %s126, %s127
      %p141 = scmp.eq.s32.totalorder %s18, 3
      %p142 = por %p140, %p141
      %p144 = scmp.ne.s32.totalorder %s127, %s143
      %p145 = scmp.eq.s32.totalorder %s18, 0
      %p146 = por %p144, %p145
      %p147 = scmp.le.s32.totalorder 1, %s12
      %p148 = scmp.lt.s32.totalorder %s12, 5
      %p149 = pnand %p147, %p148
      %p150 = pneg %p149
      // Predicated region
      $region9: #{tpu_custom_call.1} parent=5 // pred_check
        _
      $region10: #{tpu_custom_call.1} parent=5 // pred_check_branch
        %152 = sbr.rel (%p149) target = $region12
      $region11: #{tpu_custom_call.1} parent=5 // pred_region
        %s153 = ssub.s32 %s12, 1
        // Predicated region
        $region13: #{tpu_custom_call.1} parent=11 // pred_check
          %p154 = pneg %p83
        $region14: #{tpu_custom_call.1} parent=11 // pred_check_branch
          %156 = sbr.rel (%p154) target = $region16
        $region15: #{tpu_custom_call.1} parent=11 // pred_region
          %p157 = scmp.lt.s32.totalorder %s24, 0
          %s158 = scalar_select %p157, %s24, 0
          %s159 = smul.addr %s158, 2
          %s160 = scalar_lea.vmem %s1, %s159
        $region16: #{tpu_custom_call.1} parent=11 // pred_fallthru
          _
        // Predicated region
        $region17: #{tpu_custom_call.1} parent=11 // pred_check
          %p161 = pneg %p109
        $region18: #{tpu_custom_call.1} parent=11 // pred_check_branch
          %163 = sbr.rel (%p161) target = $region20
        $region19: #{tpu_custom_call.1} parent=11 // pred_region
          %p164 = scmp.lt.s32.totalorder %s24, 0
          %s165 = scalar_select %p164, %s24, 0
          %s166 = scalar_lea.vmem %s2, %s165
        $region20: #{tpu_custom_call.1} parent=11 // pred_fallthru
          _
      $region12: #{tpu_custom_call.1} parent=5 // pred_fallthru
        _
      %p167 = scmp.lt.s32.totalorder %s12, 4
      // Predicated region
      $region21: #{tpu_custom_call.1} parent=5 // pred_check
        %p168 = pneg %p167
      $region22: #{tpu_custom_call.1} parent=5 // pred_check_branch
        %170 = sbr.rel (%p168) target = $region24
      $region23: #{tpu_custom_call.1} parent=5 // pred_region
        // Predicated region
        $region25: #{tpu_custom_call.1} parent=23 // pred_check
          %p171 = pneg %p51
        $region26: #{tpu_custom_call.1} parent=23 // pred_check_branch
          %173 = sbr.rel (%p171) target = $region28
        $region27: #{tpu_custom_call.1} parent=23 // pred_region
          %p174 = scmp.lt.s32.totalorder %s19, 1
          %s175 = scalar_select %p174, %s19, 1
          %s176 = smul.addr %s175, 54
          %s177 = smul.addr %s176, 4
          %s178 = scalar_lea.vmem %s0, %s177
        $region28: #{tpu_custom_call.1} parent=23 // pred_fallthru
          _
      $region24: #{tpu_custom_call.1} parent=5 // pred_fallthru
        _
      %p179 = scmp.le.s32.totalorder 1, %s12
      %p180 = scmp.lt.s32.totalorder %s12, 5
      %p181 = pnand %p179, %p180
      %p182 = pneg %p181
      // Predicated region
      $region29: #{tpu_custom_call.1} parent=5 // pred_check
        _
      $region30: #{tpu_custom_call.1} parent=5 // pred_check_branch
        %184 = sbr.rel (%p181) target = $region32
      $region31: #{tpu_custom_call.1} parent=5 // pred_region
        %s185 = ssub.s32 %s12, 1
        %p186 = scmp.lt.s32.totalorder %s22, 1
        %s187 = scalar_select %p186, %s22, 1
        %s188 = smul.addr %s187, 54
        %s189 = smul.addr %s188, 4
        %s190 = scalar_lea.vmem %s0, %s189
        %p191 = pneg %p57
        %p192 = pneg %p54
        %p193 = scmp.lt.s32.totalorder %s24, 0
        %s194 = scalar_select %p193, %s24, 0
        %s195 = smul.addr %s194, 2
        %s196 = scalar_lea.vmem %s1, %s195
        %p197 = pneg %p83
        %p198 = pneg %p80
        %p199 = scmp.lt.s32.totalorder %s24, 0
        %s200 = scalar_select %p199, %s24, 0
        %s201 = scalar_lea.vmem %s2, %s200
        %p202 = pneg %p109
        %p203 = pneg %p106
        %p204 = pneg %p139
        %p205 = pneg %p136
        %s206 = sand.u32 %s126, 1
        %s207 = scalar_lea.sflag [#allocation3], %s206
        %s208 = sand.u32 %s126, 1
        %s209 = smul.addr %s208, 128
        %s210 = scalar_lea.vmem [#allocation2], %s209
        %p211 = scmp.lt.s32.totalorder %s22, 1
        %s212 = scalar_select %p211, %s22, 1
        %s213 = smul.addr %s212, 54
        %s214 = smul.addr %s213, 4
        %s215 = scalar_lea.vmem %s0, %s214
        %p216 = scmp.lt.s32.totalorder %s24, 0
        %s217 = scalar_select %p216, %s24, 0
        %s218 = smul.addr %s217, 2
        %s219 = scalar_lea.vmem %s1, %s218
        %p220 = scmp.lt.s32.totalorder %s24, 0
        %s221 = scalar_select %p220, %s24, 0
        %s222 = scalar_lea.vmem %s2, %s221
        %s223 = smul.u32 8, %s23
        %s225 = smul.u32 %s23, 8
        %s226 = smul.u32 %s225, 3
        %s227 = smul.addr %s226, 4
        %s228 = scalar_lea.vmem %s215, %s227
        %v229 = vld [vmem:[%s228] sm:$0xf]
        %v230 = vld [vmem:[%s228 + $0x4] sm:$0xf]
        %v231 = vld [vmem:[%s228 + $0x8] sm:$0xf]
        %v232 = vld [vmem:[%s228 + $0xc] sm:$0xf]
        %v233 = vld [vmem:[%s228 + $0x10] sm:$0xf]
        %v234 = vld [vmem:[%s228 + $0x14] sm:$0xf]
        %v235 = vld [vmem:[%s228 + $0x18] sm:$0xf]
        %v236 = vld [vmem:[%s228 + $0x1c] sm:$0xf]
        %v237 = vld [vmem:[%s228 + $0x20] sm:$0xf]
        %v238 = vld [vmem:[%s228 + $0x24] sm:$0xf]
        %v239 = vld [vmem:[%s228 + $0x28] sm:$0xf]
        %v240 = vld [vmem:[%s228 + $0x2c] sm:$0xf]
        %v241 = vld [vmem:[%s228 + $0x30] sm:$0xf]
        %v242 = vld [vmem:[%s228 + $0x34] sm:$0xf]
        %v243 = vld [vmem:[%s228 + $0x38] sm:$0xf]
        %v244 = vld [vmem:[%s228 + $0x3c] sm:$0xf]
        %v245 = vld [vmem:[%s228 + $0x40] sm:$0xf]
        %v246 = vld [vmem:[%s228 + $0x44] sm:$0xf]
        %v247 = vld [vmem:[%s228 + $0x48] sm:$0xf]
        %v248 = vld [vmem:[%s228 + $0x4c] sm:$0xf]
        %v249 = vld [vmem:[%s228 + $0x50] sm:$0xf]
        %v250 = vld [vmem:[%s228 + $0x54] sm:$0xf]
        %v251 = vld [vmem:[%s228 + $0x58] sm:$0xf]
        %v252 = vld [vmem:[%s228 + $0x5c] sm:$0xf]
        %v253 = vld [vmem:[%s228 + $0x60] sm:$0xf]
        %v254 = vld [vmem:[%s228 + $0x64] sm:$0xf]
        %v255 = vld [vmem:[%s228 + $0x68] sm:$0xf]
        %v256 = vld [vmem:[%s228 + $0x6c] sm:$0xf]
        %v257 = vld [vmem:[%s228 + $0x70] sm:$0xf]
        %v258 = vld [vmem:[%s228 + $0x74] sm:$0xf]
        %v259 = vunpack.c.l.bf16 %v229
        %v260 = vunpack.c.l.bf16 %v230
        %v261 = vunpack.c.l.bf16 %v231
        %v262 = vunpack.c.l.bf16 %v232
        %v263 = vunpack.c.l.bf16 %v233
        %v264 = vunpack.c.l.bf16 %v234
        %v265 = vunpack.c.l.bf16 %v235
        %v266 = vunpack.c.l.bf16 %v236
        %v267 = vunpack.c.l.bf16 %v237
        %v268 = vunpack.c.l.bf16 %v238
        %v269 = vunpack.c.l.bf16 %v239
        %v270 = vunpack.c.l.bf16 %v240
        %v271 = vunpack.c.l.bf16 %v241
        %v272 = vunpack.c.l.bf16 %v242
        %v273 = vunpack.c.l.bf16 %v243
        %v274 = vunpack.c.l.bf16 %v244
        %v275 = vunpack.c.l.bf16 %v245
        %v276 = vunpack.c.l.bf16 %v246
        %v277 = vunpack.c.l.bf16 %v247
        %v278 = vunpack.c.l.bf16 %v248
        %v279 = vunpack.c.l.bf16 %v249
        %v280 = vunpack.c.l.bf16 %v250
        %v281 = vunpack.c.l.bf16 %v251
        %v282 = vunpack.c.l.bf16 %v252
        %v283 = vunpack.c.l.bf16 %v253
        %v284 = vunpack.c.l.bf16 %v254
        %v285 = vunpack.c.l.bf16 %v255
        %v286 = vunpack.c.l.bf16 %v256
        %v287 = vunpack.c.l.bf16 %v257
        %v288 = vunpack.c.l.bf16 %v258
        %v289 = vpack.c.bf16 %v260, %v259
        %v290 = vpack.c.bf16 %v263, %v262
        %v291 = vpack.c.bf16 %v266, %v265
        %v292 = vpack.c.bf16 %v269, %v268
        %v293 = vpack.c.bf16 %v272, %v271
        %v294 = vpack.c.bf16 %v275, %v274
        %v295 = vpack.c.bf16 %v278, %v277
        %v296 = vpack.c.bf16 %v281, %v280
        %v297 = vld [vmem:[%s219] sm:$0x3]
        %vm322 = vcmask 1046528
        %v323 = vrot.slane %v259, 1
        %v324 = vrot.slane %v260, 1
        %v325 = vsel %vm322, %v323, %v324
        %v326 = vrot.slane %v261, 1
        %v327 = vsel %vm322, %v324, %v326
        %v328 = vrot.slane %v262, 1
        %v329 = vrot.slane %v263, 1
        %v330 = vsel %vm322, %v328, %v329
        %v331 = vrot.slane %v264, 1
        %v332 = vsel %vm322, %v329, %v331
        %v333 = vrot.slane %v265, 1
        %v334 = vrot.slane %v266, 1
        %v335 = vsel %vm322, %v333, %v334
        %v336 = vrot.slane %v267, 1
        %v337 = vsel %vm322, %v334, %v336
        %v338 = vrot.slane %v268, 1
        %v339 = vrot.slane %v269, 1
        %v340 = vsel %vm322, %v338, %v339
        %v341 = vrot.slane %v270, 1
        %v342 = vsel %vm322, %v339, %v341
        %v343 = vrot.slane %v271, 1
        %v344 = vrot.slane %v272, 1
        %v345 = vsel %vm322, %v343, %v344
        %v346 = vrot.slane %v273, 1
        %v347 = vsel %vm322, %v344, %v346
        %v348 = vrot.slane %v274, 1
        %v349 = vrot.slane %v275, 1
        %v350 = vsel %vm322, %v348, %v349
        %v351 = vrot.slane %v276, 1
        %v352 = vsel %vm322, %v349, %v351
        %v353 = vrot.slane %v277, 1
        %v354 = vrot.slane %v278, 1
        %v355 = vsel %vm322, %v353, %v354
        %v356 = vrot.slane %v279, 1
        %v357 = vsel %vm322, %v354, %v356
        %v358 = vrot.slane %v280, 1
        %v359 = vrot.slane %v281, 1
        %v360 = vsel %vm322, %v358, %v359
        %v361 = vrot.slane %v282, 1
        %v362 = vsel %vm322, %v359, %v361
        %v379 = vpack.c.bf16 %v327, %v325
        %v380 = vpack.c.bf16 %v332, %v330
        %v381 = vpack.c.bf16 %v337, %v335
        %v382 = vpack.c.bf16 %v342, %v340
        %v383 = vpack.c.bf16 %v347, %v345
        %v384 = vpack.c.bf16 %v352, %v350
        %v385 = vpack.c.bf16 %v357, %v355
        %v386 = vpack.c.bf16 %v362, %v360
        %s387 = scalar_lea.vmem %s219, 2
        %v388 = vld [vmem:[%s387] sm:$0x3]
        %vm389 = vcmask 31744
        %v391 = vsel %vm389, %v379, 0
        %v394 = vsel %vm389, %v380, 0
        %v397 = vsel %vm389, %v381, 0
        %v400 = vsel %vm389, %v382, 0
        %v403 = vsel %vm389, %v383, 0
        %v406 = vsel %vm389, %v384, 0
        %v409 = vsel %vm389, %v385, 0
        %v412 = vsel %vm389, %v386, 0
        %vm414 = vcmask 1041408
        %v416 = vsel %vm414, %v388, 0
        %418 = vmatprep.subr.bf16.mxu0 0
        %419 = vmatpush1.bf16.msra.mxu0 0
        %420 = vmatprep.subr.bf16.mxu0 0
        %421 = vmatpush1.bf16.msra.mxu0 0
        %422 = vmatprep.subr.bf16.mxu0 0
        %423 = vmatpush1.bf16.msra.mxu0 0
        %424 = vmatprep.subr.bf16.mxu0 0
        %425 = vmatpush1.bf16.msra.mxu0 0
        %426 = vmatprep.subr.bf16.mxu0 0
        %427 = vmatpush1.bf16.msra.mxu0 0
        %428 = vmatprep.subr.bf16.mxu0 0
        %429 = vmatpush1.bf16.msra.mxu0 0
        %430 = vmatprep.subr.bf16.mxu0 0
        %431 = vmatpush1.bf16.msra.mxu0 0
        %432 = vmatprep.subr.bf16.mxu0 0
        %433 = vmatpush1.bf16.msra.mxu0 %v416
        %434 = vmatprep.subr.bf16.mxu0 0
        %435 = vmatpush2.bf16.msra.mxu0 0
        %436 = vmatprep.subr.bf16.mxu0 0
        %437 = vmatpush2.bf16.msra.mxu0 0
        %438 = vmatprep.subr.bf16.mxu0 0
        %439 = vmatpush2.bf16.msra.mxu0 0
        %440 = vmatprep.subr.bf16.mxu0 0
        %441 = vmatpush2.bf16.msra.mxu0 0
        %442 = vmatprep.subr.bf16.mxu0 0
        %443 = vmatpush2.bf16.msra.mxu0 0
        %444 = vmatprep.subr.bf16.mxu0 0
        %445 = vmatpush2.bf16.msra.mxu0 0
        %446 = vmatprep.subr.bf16.mxu0 0
        %447 = vmatpush2.bf16.msra.mxu0 0
        %448 = vmatprep.subr.bf16.mxu0 0
        %449 = vmatpush2.bf16.msra.mxu0 0
        %450 = vmatprep.mubr.bf16.mxu0 0
        %451 = vmatmul.mubr.bf16.gmra.mxu0 %v391
        %v452 = vpop.f32.mrf.mxu0
        %v453 = vadd.f32 0.0, %v452
        %v454 = vpop.f32.mrf.mxu0
        %v455 = vpop.f32.mrf.mxu0
        %v456 = vadd.f32 0.0, %v455
        %v457 = vpop.f32.mrf.mxu0
        %458 = vmatprep.mubr.bf16.mxu0 0
        %459 = vmatmul.mubr.bf16.gmra.mxu0 %v394
        %v460 = vpop.f32.mrf.mxu0
        %v461 = vadd.f32 0.0, %v460
        %v462 = vpop.f32.mrf.mxu0
        %v463 = vpop.f32.mrf.mxu0
        %v464 = vadd.f32 0.0, %v463
        %v465 = vpop.f32.mrf.mxu0
        %466 = vmatprep.mubr.bf16.mxu0 0
        %467 = vmatmul.mubr.bf16.gmra.mxu0 %v397
        %v468 = vpop.f32.mrf.mxu0
        %v469 = vadd.f32 0.0, %v468
        %v470 = vpop.f32.mrf.mxu0
        %v471 = vpop.f32.mrf.mxu0
        %v472 = vadd.f32 0.0, %v471
        %v473 = vpop.f32.mrf.mxu0
        %474 = vmatprep.mubr.bf16.mxu0 0
        %475 = vmatmul.mubr.bf16.gmra.mxu0 %v400
        %v476 = vpop.f32.mrf.mxu0
        %v477 = vadd.f32 0.0, %v476
        %v478 = vpop.f32.mrf.mxu0
        %v479 = vpop.f32.mrf.mxu0
        %v480 = vadd.f32 0.0, %v479
        %v481 = vpop.f32.mrf.mxu0
        %482 = vmatprep.mubr.bf16.mxu0 0
        %483 = vmatmul.mubr.bf16.gmra.mxu0 %v403
        %v484 = vpop.f32.mrf.mxu0
        %v485 = vadd.f32 0.0, %v484
        %v486 = vpop.f32.mrf.mxu0
        %v487 = vpop.f32.mrf.mxu0
        %v488 = vadd.f32 0.0, %v487
        %v489 = vpop.f32.mrf.mxu0
        %490 = vmatprep.mubr.bf16.mxu0 0
        %491 = vmatmul.mubr.bf16.gmra.mxu0 %v406
        %v492 = vpop.f32.mrf.mxu0
        %v493 = vadd.f32 0.0, %v492
        %v494 = vpop.f32.mrf.mxu0
        %v495 = vpop.f32.mrf.mxu0
        %v496 = vadd.f32 0.0, %v495
        %v497 = vpop.f32.mrf.mxu0
        %498 = vmatprep.mubr.bf16.mxu0 0
        %499 = vmatmul.mubr.bf16.gmra.mxu0 %v409
        %v500 = vpop.f32.mrf.mxu0
        %v501 = vadd.f32 0.0, %v500
        %v502 = vpop.f32.mrf.mxu0
        %v503 = vpop.f32.mrf.mxu0
        %v504 = vadd.f32 0.0, %v503
        %v505 = vpop.f32.mrf.mxu0
        %506 = vmatprep.mubr.bf16.mxu0 0
        %507 = vmatmul.mubr.bf16.gmra.mxu0 %v412
        %v508 = vpop.f32.mrf.mxu0
        %v509 = vadd.f32 0.0, %v508
        %v510 = vpop.f32.mrf.mxu0
        %v511 = vpop.f32.mrf.mxu0
        %v512 = vadd.f32 0.0, %v511
        %v513 = vpop.f32.mrf.mxu0
        %514 = vdwg.mxu0
        %v516 = vsel %vm389, %v289, 0
        %v519 = vsel %vm389, %v290, 0
        %v522 = vsel %vm389, %v291, 0
        %v525 = vsel %vm389, %v292, 0
        %v528 = vsel %vm389, %v293, 0
        %v531 = vsel %vm389, %v294, 0
        %v534 = vsel %vm389, %v295, 0
        %v537 = vsel %vm389, %v296, 0
        %v540 = vsel %vm414, %v297, 0
        %542 = vmatprep.subr.bf16.mxu0 0
        %543 = vmatpush1.bf16.msra.mxu0 0
        %544 = vmatprep.subr.bf16.mxu0 0
        %545 = vmatpush1.bf16.msra.mxu0 0
        %546 = vmatprep.subr.bf16.mxu0 0
        %547 = vmatpush1.bf16.msra.mxu0 0
        %548 = vmatprep.subr.bf16.mxu0 0
        %549 = vmatpush1.bf16.msra.mxu0 0
        %550 = vmatprep.subr.bf16.mxu0 0
        %551 = vmatpush1.bf16.msra.mxu0 0
        %552 = vmatprep.subr.bf16.mxu0 0
        %553 = vmatpush1.bf16.msra.mxu0 0
        %554 = vmatprep.subr.bf16.mxu0 0
        %555 = vmatpush1.bf16.msra.mxu0 0
        %556 = vmatprep.subr.bf16.mxu0 0
        %557 = vmatpush1.bf16.msra.mxu0 %v540
        %558 = vmatprep.subr.bf16.mxu0 0
        %559 = vmatpush2.bf16.msra.mxu0 0
        %560 = vmatprep.subr.bf16.mxu0 0
        %561 = vmatpush2.bf16.msra.mxu0 0
        %562 = vmatprep.subr.bf16.mxu0 0
        %563 = vmatpush2.bf16.msra.mxu0 0
        %564 = vmatprep.subr.bf16.mxu0 0
        %565 = vmatpush2.bf16.msra.mxu0 0
        %566 = vmatprep.subr.bf16.mxu0 0
        %567 = vmatpush2.bf16.msra.mxu0 0
        %568 = vmatprep.subr.bf16.mxu0 0
        %569 = vmatpush2.bf16.msra.mxu0 0
        %570 = vmatprep.subr.bf16.mxu0 0
        %571 = vmatpush2.bf16.msra.mxu0 0
        %572 = vmatprep.subr.bf16.mxu0 0
        %573 = vmatpush2.bf16.msra.mxu0 0
        %574 = vmatprep.mubr.bf16.mxu0 0
        %575 = vmatmul.mubr.bf16.gmra.mxu0 %v516
        %v576 = vpop.f32.mrf.mxu0
        %v577 = vadd.f32 %v453, %v576
        %v578 = vpop.f32.mrf.mxu0
        %v579 = vpop.f32.mrf.mxu0
        %v580 = vadd.f32 %v456, %v579
        %v581 = vpop.f32.mrf.mxu0
        %582 = vmatprep.mubr.bf16.mxu0 0
        %583 = vmatmul.mubr.bf16.gmra.mxu0 %v519
        %v584 = vpop.f32.mrf.mxu0
        %v585 = vadd.f32 %v461, %v584
        %v586 = vpop.f32.mrf.mxu0
        %v587 = vpop.f32.mrf.mxu0
        %v588 = vadd.f32 %v464, %v587
        %v589 = vpop.f32.mrf.mxu0
        %590 = vmatprep.mubr.bf16.mxu0 0
        %591 = vmatmul.mubr.bf16.gmra.mxu0 %v522
        %v592 = vpop.f32.mrf.mxu0
        %v593 = vadd.f32 %v469, %v592
        %v594 = vpop.f32.mrf.mxu0
        %v595 = vpop.f32.mrf.mxu0
        %v596 = vadd.f32 %v472, %v595
        %v597 = vpop.f32.mrf.mxu0
        %598 = vmatprep.mubr.bf16.mxu0 0
        %599 = vmatmul.mubr.bf16.gmra.mxu0 %v525
        %v600 = vpop.f32.mrf.mxu0
        %v601 = vadd.f32 %v477, %v600
        %v602 = vpop.f32.mrf.mxu0
        %v603 = vpop.f32.mrf.mxu0
        %v604 = vadd.f32 %v480, %v603
        %v605 = vpop.f32.mrf.mxu0
        %606 = vmatprep.mubr.bf16.mxu0 0
        %607 = vmatmul.mubr.bf16.gmra.mxu0 %v528
        %v608 = vpop.f32.mrf.mxu0
        %v609 = vadd.f32 %v485, %v608
        %v610 = vpop.f32.mrf.mxu0
        %v611 = vpop.f32.mrf.mxu0
        %v612 = vadd.f32 %v488, %v611
        %v613 = vpop.f32.mrf.mxu0
        %614 = vmatprep.mubr.bf16.mxu0 0
        %615 = vmatmul.mubr.bf16.gmra.mxu0 %v531
        %v616 = vpop.f32.mrf.mxu0
        %v617 = vadd.f32 %v493, %v616
        %v618 = vpop.f32.mrf.mxu0
        %v619 = vpop.f32.mrf.mxu0
        %v620 = vadd.f32 %v496, %v619
        %v621 = vpop.f32.mrf.mxu0
        %622 = vmatprep.mubr.bf16.mxu0 0
        %623 = vmatmul.mubr.bf16.gmra.mxu0 %v534
        %v624 = vpop.f32.mrf.mxu0
        %v625 = vadd.f32 %v501, %v624
        %v626 = vpop.f32.mrf.mxu0
        %v627 = vpop.f32.mrf.mxu0
        %v628 = vadd.f32 %v504, %v627
        %v629 = vpop.f32.mrf.mxu0
        %630 = vmatprep.mubr.bf16.mxu0 0
        %631 = vmatmul.mubr.bf16.gmra.mxu0 %v537
        %v632 = vpop.f32.mrf.mxu0
        %v633 = vadd.f32 %v509, %v632
        %v634 = vpop.f32.mrf.mxu0
        %v635 = vpop.f32.mrf.mxu0
        %v636 = vadd.f32 %v512, %v635
        %v637 = vpop.f32.mrf.mxu0
        %638 = vdwg.mxu0
        %vm639 = vcmask 1045504
        %v640 = vrot.slane %v259, 2
        %v641 = vrot.slane %v260, 2
        %v642 = vsel %vm639, %v640, %v641
        %v643 = vrot.slane %v261, 2
        %v644 = vsel %vm639, %v641, %v643
        %v645 = vrot.slane %v262, 2
        %v646 = vrot.slane %v263, 2
        %v647 = vsel %vm639, %v645, %v646
        %v648 = vrot.slane %v264, 2
        %v649 = vsel %vm639, %v646, %v648
        %v650 = vrot.slane %v265, 2
        %v651 = vrot.slane %v266, 2
        %v652 = vsel %vm639, %v650, %v651
        %v653 = vrot.slane %v267, 2
        %v654 = vsel %vm639, %v651, %v653
        %v655 = vrot.slane %v268, 2
        %v656 = vrot.slane %v269, 2
        %v657 = vsel %vm639, %v655, %v656
        %v658 = vrot.slane %v270, 2
        %v659 = vsel %vm639, %v656, %v658
        %v660 = vrot.slane %v271, 2
        %v661 = vrot.slane %v272, 2
        %v662 = vsel %vm639, %v660, %v661
        %v663 = vrot.slane %v273, 2
        %v664 = vsel %vm639, %v661, %v663
        %v665 = vrot.slane %v274, 2
        %v666 = vrot.slane %v275, 2
        %v667 = vsel %vm639, %v665, %v666
        %v668 = vrot.slane %v276, 2
        %v669 = vsel %vm639, %v666, %v668
        %v670 = vrot.slane %v277, 2
        %v671 = vrot.slane %v278, 2
        %v672 = vsel %vm639, %v670, %v671
        %v673 = vrot.slane %v279, 2
        %v674 = vsel %vm639, %v671, %v673
        %v675 = vrot.slane %v280, 2
        %v676 = vrot.slane %v281, 2
        %v677 = vsel %vm639, %v675, %v676
        %v678 = vrot.slane %v282, 2
        %v679 = vsel %vm639, %v676, %v678
        %v696 = vpack.c.bf16 %v644, %v642
        %v697 = vpack.c.bf16 %v649, %v647
        %v698 = vpack.c.bf16 %v654, %v652
        %v699 = vpack.c.bf16 %v659, %v657
        %v700 = vpack.c.bf16 %v664, %v662
        %v701 = vpack.c.bf16 %v669, %v667
        %v702 = vpack.c.bf16 %v674, %v672
        %v703 = vpack.c.bf16 %v679, %v677
        %s704 = scalar_lea.vmem %s219, 4
        %v705 = vld [vmem:[%s704] sm:$0x3]
        %v707 = vsel %vm389, %v696, 0
        %v710 = vsel %vm389, %v697, 0
        %v713 = vsel %vm389, %v698, 0
        %v716 = vsel %vm389, %v699, 0
        %v719 = vsel %vm389, %v700, 0
        %v722 = vsel %vm389, %v701, 0
        %v725 = vsel %vm389, %v702, 0
        %v728 = vsel %vm389, %v703, 0
        %v731 = vsel %vm414, %v705, 0
        %733 = vmatprep.subr.bf16.mxu0 0
        %734 = vmatpush1.bf16.msra.mxu0 0
        %735 = vmatprep.subr.bf16.mxu0 0
        %736 = vmatpush1.bf16.msra.mxu0 0
        %737 = vmatprep.subr.bf16.mxu0 0
        %738 = vmatpush1.bf16.msra.mxu0 0
        %739 = vmatprep.subr.bf16.mxu0 0
        %740 = vmatpush1.bf16.msra.mxu0 0
        %741 = vmatprep.subr.bf16.mxu0 0
        %742 = vmatpush1.bf16.msra.mxu0 0
        %743 = vmatprep.subr.bf16.mxu0 0
        %744 = vmatpush1.bf16.msra.mxu0 0
        %745 = vmatprep.subr.bf16.mxu0 0
        %746 = vmatpush1.bf16.msra.mxu0 0
        %747 = vmatprep.subr.bf16.mxu0 0
        %748 = vmatpush1.bf16.msra.mxu0 %v731
        %749 = vmatprep.subr.bf16.mxu0 0
        %750 = vmatpush2.bf16.msra.mxu0 0
        %751 = vmatprep.subr.bf16.mxu0 0
        %752 = vmatpush2.bf16.msra.mxu0 0
        %753 = vmatprep.subr.bf16.mxu0 0
        %754 = vmatpush2.bf16.msra.mxu0 0
        %755 = vmatprep.subr.bf16.mxu0 0
        %756 = vmatpush2.bf16.msra.mxu0 0
        %757 = vmatprep.subr.bf16.mxu0 0
        %758 = vmatpush2.bf16.msra.mxu0 0
        %759 = vmatprep.subr.bf16.mxu0 0
        %760 = vmatpush2.bf16.msra.mxu0 0
        %761 = vmatprep.subr.bf16.mxu0 0
        %762 = vmatpush2.bf16.msra.mxu0 0
        %763 = vmatprep.subr.bf16.mxu0 0
        %764 = vmatpush2.bf16.msra.mxu0 0
        %765 = vmatprep.mubr.bf16.mxu0 0
        %766 = vmatmul.mubr.bf16.gmra.mxu0 %v707
        %v767 = vpop.f32.mrf.mxu0
        %v768 = vadd.f32 0.0, %v767
        %v769 = vpop.f32.mrf.mxu0
        %v770 = vpop.f32.mrf.mxu0
        %v771 = vadd.f32 0.0, %v770
        %v772 = vpop.f32.mrf.mxu0
        %773 = vmatprep.mubr.bf16.mxu0 0
        %774 = vmatmul.mubr.bf16.gmra.mxu0 %v710
        %v775 = vpop.f32.mrf.mxu0
        %v776 = vadd.f32 0.0, %v775
        %v777 = vpop.f32.mrf.mxu0
        %v778 = vpop.f32.mrf.mxu0
        %v779 = vadd.f32 0.0, %v778
        %v780 = vpop.f32.mrf.mxu0
        %781 = vmatprep.mubr.bf16.mxu0 0
        %782 = vmatmul.mubr.bf16.gmra.mxu0 %v713
        %v783 = vpop.f32.mrf.mxu0
        %v784 = vadd.f32 0.0, %v783
        %v785 = vpop.f32.mrf.mxu0
        %v786 = vpop.f32.mrf.mxu0
        %v787 = vadd.f32 0.0, %v786
        %v788 = vpop.f32.mrf.mxu0
        %789 = vmatprep.mubr.bf16.mxu0 0
        %790 = vmatmul.mubr.bf16.gmra.mxu0 %v716
        %v791 = vpop.f32.mrf.mxu0
        %v792 = vadd.f32 0.0, %v791
        %v793 = vpop.f32.mrf.mxu0
        %v794 = vpop.f32.mrf.mxu0
        %v795 = vadd.f32 0.0, %v794
        %v796 = vpop.f32.mrf.mxu0
        %797 = vmatprep.mubr.bf16.mxu0 0
        %798 = vmatmul.mubr.bf16.gmra.mxu0 %v719
        %v799 = vpop.f32.mrf.mxu0
        %v800 = vadd.f32 0.0, %v799
        %v801 = vpop.f32.mrf.mxu0
        %v802 = vpop.f32.mrf.mxu0
        %v803 = vadd.f32 0.0, %v802
        %v804 = vpop.f32.mrf.mxu0
        %805 = vmatprep.mubr.bf16.mxu0 0
        %806 = vmatmul.mubr.bf16.gmra.mxu0 %v722
        %v807 = vpop.f32.mrf.mxu0
        %v808 = vadd.f32 0.0, %v807
        %v809 = vpop.f32.mrf.mxu0
        %v810 = vpop.f32.mrf.mxu0
        %v811 = vadd.f32 0.0, %v810
        %v812 = vpop.f32.mrf.mxu0
        %813 = vmatprep.mubr.bf16.mxu0 0
        %814 = vmatmul.mubr.bf16.gmra.mxu0 %v725
        %v815 = vpop.f32.mrf.mxu0
        %v816 = vadd.f32 0.0, %v815
        %v817 = vpop.f32.mrf.mxu0
        %v818 = vpop.f32.mrf.mxu0
        %v819 = vadd.f32 0.0, %v818
        %v820 = vpop.f32.mrf.mxu0
        %821 = vmatprep.mubr.bf16.mxu0 0
        %822 = vmatmul.mubr.bf16.gmra.mxu0 %v728
        %v823 = vpop.f32.mrf.mxu0
        %v824 = vadd.f32 0.0, %v823
        %v825 = vpop.f32.mrf.mxu0
        %v826 = vpop.f32.mrf.mxu0
        %v827 = vadd.f32 0.0, %v826
        %v828 = vpop.f32.mrf.mxu0
        %829 = vdwg.mxu0
        %v830 = vadd.f32 %v577, %v768
        %v831 = vadd.f32 %v580, %v771
        %v832 = vadd.f32 %v585, %v776
        %v833 = vadd.f32 %v588, %v779
        %v834 = vadd.f32 %v593, %v784
        %v835 = vadd.f32 %v596, %v787
        %v836 = vadd.f32 %v601, %v792
        %v837 = vadd.f32 %v604, %v795
        %v838 = vadd.f32 %v609, %v800
        %v839 = vadd.f32 %v612, %v803
        %v840 = vadd.f32 %v617, %v808
        %v841 = vadd.f32 %v620, %v811
        %v842 = vadd.f32 %v625, %v816
        %v843 = vadd.f32 %v628, %v819
        %v844 = vadd.f32 %v633, %v824
        %v845 = vadd.f32 %v636, %v827
        %v846 = vpack.c.bf16 %v284, %v283
        %s847 = scalar_lea.vmem %s219, 6
        %v848 = vld [vmem:[%s847] sm:$0x3]
        %v850 = vsel %vm389, %v846, 0
        %v853 = vsel %vm414, %v848, 0
        %855 = vmatprep.subr.bf16.mxu0 0
        %856 = vmatpush1.bf16.msra.mxu0 0
        %857 = vmatprep.subr.bf16.mxu0 0
        %858 = vmatpush1.bf16.msra.mxu0 0
        %859 = vmatprep.subr.bf16.mxu0 0
        %860 = vmatpush1.bf16.msra.mxu0 0
        %861 = vmatprep.subr.bf16.mxu0 0
        %862 = vmatpush1.bf16.msra.mxu0 0
        %863 = vmatprep.subr.bf16.mxu0 0
        %864 = vmatpush1.bf16.msra.mxu0 0
        %865 = vmatprep.subr.bf16.mxu0 0
        %866 = vmatpush1.bf16.msra.mxu0 0
        %867 = vmatprep.subr.bf16.mxu0 0
        %868 = vmatpush1.bf16.msra.mxu0 0
        %869 = vmatprep.subr.bf16.mxu0 0
        %870 = vmatpush1.bf16.msra.mxu0 %v853
        %871 = vmatprep.subr.bf16.mxu0 0
        %872 = vmatpush2.bf16.msra.mxu0 0
        %873 = vmatprep.subr.bf16.mxu0 0
        %874 = vmatpush2.bf16.msra.mxu0 0
        %875 = vmatprep.subr.bf16.mxu0 0
        %876 = vmatpush2.bf16.msra.mxu0 0
        %877 = vmatprep.subr.bf16.mxu0 0
        %878 = vmatpush2.bf16.msra.mxu0 0
        %879 = vmatprep.subr.bf16.mxu0 0
        %880 = vmatpush2.bf16.msra.mxu0 0
        %881 = vmatprep.subr.bf16.mxu0 0
        %882 = vmatpush2.bf16.msra.mxu0 0
        %883 = vmatprep.subr.bf16.mxu0 0
        %884 = vmatpush2.bf16.msra.mxu0 0
        %885 = vmatprep.subr.bf16.mxu0 0
        %886 = vmatpush2.bf16.msra.mxu0 0
        %887 = vmatprep.mubr.bf16.mxu0 0
        %888 = vmatmul.mubr.bf16.gmra.mxu0 %v519
        %v889 = vpop.f32.mrf.mxu0
        %v890 = vadd.f32 0.0, %v889
        %v891 = vpop.f32.mrf.mxu0
        %v892 = vpop.f32.mrf.mxu0
        %v893 = vadd.f32 0.0, %v892
        %v894 = vpop.f32.mrf.mxu0
        %895 = vmatprep.mubr.bf16.mxu0 0
        %896 = vmatmul.mubr.bf16.gmra.mxu0 %v522
        %v897 = vpop.f32.mrf.mxu0
        %v898 = vadd.f32 0.0, %v897
        %v899 = vpop.f32.mrf.mxu0
        %v900 = vpop.f32.mrf.mxu0
        %v901 = vadd.f32 0.0, %v900
        %v902 = vpop.f32.mrf.mxu0
        %903 = vmatprep.mubr.bf16.mxu0 0
        %904 = vmatmul.mubr.bf16.gmra.mxu0 %v525
        %v905 = vpop.f32.mrf.mxu0
        %v906 = vadd.f32 0.0, %v905
        %v907 = vpop.f32.mrf.mxu0
        %v908 = vpop.f32.mrf.mxu0
        %v909 = vadd.f32 0.0, %v908
        %v910 = vpop.f32.mrf.mxu0
        %911 = vmatprep.mubr.bf16.mxu0 0
        %912 = vmatmul.mubr.bf16.gmra.mxu0 %v528
        %v913 = vpop.f32.mrf.mxu0
        %v914 = vadd.f32 0.0, %v913
        %v915 = vpop.f32.mrf.mxu0
        %v916 = vpop.f32.mrf.mxu0
        %v917 = vadd.f32 0.0, %v916
        %v918 = vpop.f32.mrf.mxu0
        %919 = vmatprep.mubr.bf16.mxu0 0
        %920 = vmatmul.mubr.bf16.gmra.mxu0 %v531
        %v921 = vpop.f32.mrf.mxu0
        %v922 = vadd.f32 0.0, %v921
        %v923 = vpop.f32.mrf.mxu0
        %v924 = vpop.f32.mrf.mxu0
        %v925 = vadd.f32 0.0, %v924
        %v926 = vpop.f32.mrf.mxu0
        %927 = vmatprep.mubr.bf16.mxu0 0
        %928 = vmatmul.mubr.bf16.gmra.mxu0 %v534
        %v929 = vpop.f32.mrf.mxu0
        %v930 = vadd.f32 0.0, %v929
        %v931 = vpop.f32.mrf.mxu0
        %v932 = vpop.f32.mrf.mxu0
        %v933 = vadd.f32 0.0, %v932
        %v934 = vpop.f32.mrf.mxu0
        %935 = vmatprep.mubr.bf16.mxu0 0
        %936 = vmatmul.mubr.bf16.gmra.mxu0 %v537
        %v937 = vpop.f32.mrf.mxu0
        %v938 = vadd.f32 0.0, %v937
        %v939 = vpop.f32.mrf.mxu0
        %v940 = vpop.f32.mrf.mxu0
        %v941 = vadd.f32 0.0, %v940
        %v942 = vpop.f32.mrf.mxu0
        %943 = vmatprep.mubr.bf16.mxu0 0
        %944 = vmatmul.mubr.bf16.gmra.mxu0 %v850
        %v945 = vpop.f32.mrf.mxu0
        %v946 = vadd.f32 0.0, %v945
        %v947 = vpop.f32.mrf.mxu0
        %v948 = vpop.f32.mrf.mxu0
        %v949 = vadd.f32 0.0, %v948
        %v950 = vpop.f32.mrf.mxu0
        %951 = vdwg.mxu0
        %v952 = vadd.f32 %v830, %v890
        %v953 = vadd.f32 %v831, %v893
        %v954 = vadd.f32 %v832, %v898
        %v955 = vadd.f32 %v833, %v901
        %v956 = vadd.f32 %v834, %v906
        %v957 = vadd.f32 %v835, %v909
        %v958 = vadd.f32 %v836, %v914
        %v959 = vadd.f32 %v837, %v917
        %v960 = vadd.f32 %v838, %v922
        %v961 = vadd.f32 %v839, %v925
        %v962 = vadd.f32 %v840, %v930
        %v963 = vadd.f32 %v841, %v933
        %v964 = vadd.f32 %v842, %v938
        %v965 = vadd.f32 %v843, %v941
        %v966 = vadd.f32 %v844, %v946
        %v967 = vadd.f32 %v845, %v949
        %v971 = vrot.slane %v283, 1
        %v972 = vrot.slane %v284, 1
        %v973 = vsel %vm322, %v971, %v972
        %v974 = vrot.slane %v285, 1
        %v975 = vsel %vm322, %v972, %v974
        %v978 = vpack.c.bf16 %v975, %v973
        %s979 = scalar_lea.vmem %s219, 8
        %v980 = vld [vmem:[%s979] sm:$0x3]
        %v982 = vsel %vm389, %v978, 0
        %v985 = vsel %vm414, %v980, 0
        %987 = vmatprep.subr.bf16.mxu0 0
        %988 = vmatpush1.bf16.msra.mxu0 0
        %989 = vmatprep.subr.bf16.mxu0 0
        %990 = vmatpush1.bf16.msra.mxu0 0
        %991 = vmatprep.subr.bf16.mxu0 0
        %992 = vmatpush1.bf16.msra.mxu0 0
        %993 = vmatprep.subr.bf16.mxu0 0
        %994 = vmatpush1.bf16.msra.mxu0 0
        %995 = vmatprep.subr.bf16.mxu0 0
        %996 = vmatpush1.bf16.msra.mxu0 0
        %997 = vmatprep.subr.bf16.mxu0 0
        %998 = vmatpush1.bf16.msra.mxu0 0
        %999 = vmatprep.subr.bf16.mxu0 0
        %1000 = vmatpush1.bf16.msra.mxu0 0
        %1001 = vmatprep.subr.bf16.mxu0 0
        %1002 = vmatpush1.bf16.msra.mxu0 %v985
        %1003 = vmatprep.subr.bf16.mxu0 0
        %1004 = vmatpush2.bf16.msra.mxu0 0
        %1005 = vmatprep.subr.bf16.mxu0 0
        %1006 = vmatpush2.bf16.msra.mxu0 0
        %1007 = vmatprep.subr.bf16.mxu0 0
        %1008 = vmatpush2.bf16.msra.mxu0 0
        %1009 = vmatprep.subr.bf16.mxu0 0
        %1010 = vmatpush2.bf16.msra.mxu0 0
        %1011 = vmatprep.subr.bf16.mxu0 0
        %1012 = vmatpush2.bf16.msra.mxu0 0
        %1013 = vmatprep.subr.bf16.mxu0 0
        %1014 = vmatpush2.bf16.msra.mxu0 0
        %1015 = vmatprep.subr.bf16.mxu0 0
        %1016 = vmatpush2.bf16.msra.mxu0 0
        %1017 = vmatprep.subr.bf16.mxu0 0
        %1018 = vmatpush2.bf16.msra.mxu0 0
        %1019 = vmatprep.mubr.bf16.mxu0 0
        %1020 = vmatmul.mubr.bf16.gmra.mxu0 %v394
        %v1021 = vpop.f32.mrf.mxu0
        %v1022 = vadd.f32 0.0, %v1021
        %v1023 = vpop.f32.mrf.mxu0
        %v1024 = vpop.f32.mrf.mxu0
        %v1025 = vadd.f32 0.0, %v1024
        %v1026 = vpop.f32.mrf.mxu0
        %1027 = vmatprep.mubr.bf16.mxu0 0
        %1028 = vmatmul.mubr.bf16.gmra.mxu0 %v397
        %v1029 = vpop.f32.mrf.mxu0
        %v1030 = vadd.f32 0.0, %v1029
        %v1031 = vpop.f32.mrf.mxu0
        %v1032 = vpop.f32.mrf.mxu0
        %v1033 = vadd.f32 0.0, %v1032
        %v1034 = vpop.f32.mrf.mxu0
        %1035 = vmatprep.mubr.bf16.mxu0 0
        %1036 = vmatmul.mubr.bf16.gmra.mxu0 %v400
        %v1037 = vpop.f32.mrf.mxu0
        %v1038 = vadd.f32 0.0, %v1037
        %v1039 = vpop.f32.mrf.mxu0
        %v1040 = vpop.f32.mrf.mxu0
        %v1041 = vadd.f32 0.0, %v1040
        %v1042 = vpop.f32.mrf.mxu0
        %1043 = vmatprep.mubr.bf16.mxu0 0
        %1044 = vmatmul.mubr.bf16.gmra.mxu0 %v403
        %v1045 = vpop.f32.mrf.mxu0
        %v1046 = vadd.f32 0.0, %v1045
        %v1047 = vpop.f32.mrf.mxu0
        %v1048 = vpop.f32.mrf.mxu0
        %v1049 = vadd.f32 0.0, %v1048
        %v1050 = vpop.f32.mrf.mxu0
        %1051 = vmatprep.mubr.bf16.mxu0 0
        %1052 = vmatmul.mubr.bf16.gmra.mxu0 %v406
        %v1053 = vpop.f32.mrf.mxu0
        %v1054 = vadd.f32 0.0, %v1053
        %v1055 = vpop.f32.mrf.mxu0
        %v1056 = vpop.f32.mrf.mxu0
        %v1057 = vadd.f32 0.0, %v1056
        %v1058 = vpop.f32.mrf.mxu0
        %1059 = vmatprep.mubr.bf16.mxu0 0
        %1060 = vmatmul.mubr.bf16.gmra.mxu0 %v409
        %v1061 = vpop.f32.mrf.mxu0
        %v1062 = vadd.f32 0.0, %v1061
        %v1063 = vpop.f32.mrf.mxu0
        %v1064 = vpop.f32.mrf.mxu0
        %v1065 = vadd.f32 0.0, %v1064
        %v1066 = vpop.f32.mrf.mxu0
        %1067 = vmatprep.mubr.bf16.mxu0 0
        %1068 = vmatmul.mubr.bf16.gmra.mxu0 %v412
        %v1069 = vpop.f32.mrf.mxu0
        %v1070 = vadd.f32 0.0, %v1069
        %v1071 = vpop.f32.mrf.mxu0
        %v1072 = vpop.f32.mrf.mxu0
        %v1073 = vadd.f32 0.0, %v1072
        %v1074 = vpop.f32.mrf.mxu0
        %1075 = vmatprep.mubr.bf16.mxu0 0
        %1076 = vmatmul.mubr.bf16.gmra.mxu0 %v982
        %v1077 = vpop.f32.mrf.mxu0
        %v1078 = vadd.f32 0.0, %v1077
        %v1079 = vpop.f32.mrf.mxu0
        %v1080 = vpop.f32.mrf.mxu0
        %v1081 = vadd.f32 0.0, %v1080
        %v1082 = vpop.f32.mrf.mxu0
        %1083 = vdwg.mxu0
        %v1084 = vadd.f32 %v952, %v1022
        %v1085 = vadd.f32 %v953, %v1025
        %v1086 = vadd.f32 %v954, %v1030
        %v1087 = vadd.f32 %v955, %v1033
        %v1088 = vadd.f32 %v956, %v1038
        %v1089 = vadd.f32 %v957, %v1041
        %v1090 = vadd.f32 %v958, %v1046
        %v1091 = vadd.f32 %v959, %v1049
        %v1092 = vadd.f32 %v960, %v1054
        %v1093 = vadd.f32 %v961, %v1057
        %v1094 = vadd.f32 %v962, %v1062
        %v1095 = vadd.f32 %v963, %v1065
        %v1096 = vadd.f32 %v964, %v1070
        %v1097 = vadd.f32 %v965, %v1073
        %v1098 = vadd.f32 %v966, %v1078
        %v1099 = vadd.f32 %v967, %v1081
        %v1100 = vrot.slane %v283, 2
        %v1101 = vrot.slane %v284, 2
        %v1102 = vsel %vm639, %v1100, %v1101
        %v1103 = vrot.slane %v285, 2
        %v1104 = vsel %vm639, %v1101, %v1103
        %v1107 = vpack.c.bf16 %v1104, %v1102
        %s1108 = scalar_lea.vmem %s219, 10
        %v1109 = vld [vmem:[%s1108] sm:$0x3]
        %v1111 = vsel %vm389, %v1107, 0
        %v1114 = vsel %vm414, %v1109, 0
        %1116 = vmatprep.subr.bf16.mxu0 0
        %1117 = vmatpush1.bf16.msra.mxu0 0
        %1118 = vmatprep.subr.bf16.mxu0 0
        %1119 = vmatpush1.bf16.msra.mxu0 0
        %1120 = vmatprep.subr.bf16.mxu0 0
        %1121 = vmatpush1.bf16.msra.mxu0 0
        %1122 = vmatprep.subr.bf16.mxu0 0
        %1123 = vmatpush1.bf16.msra.mxu0 0
        %1124 = vmatprep.subr.bf16.mxu0 0
        %1125 = vmatpush1.bf16.msra.mxu0 0
        %1126 = vmatprep.subr.bf16.mxu0 0
        %1127 = vmatpush1.bf16.msra.mxu0 0
        %1128 = vmatprep.subr.bf16.mxu0 0
        %1129 = vmatpush1.bf16.msra.mxu0 0
        %1130 = vmatprep.subr.bf16.mxu0 0
        %1131 = vmatpush1.bf16.msra.mxu0 %v1114
        %1132 = vmatprep.subr.bf16.mxu0 0
        %1133 = vmatpush2.bf16.msra.mxu0 0
        %1134 = vmatprep.subr.bf16.mxu0 0
        %1135 = vmatpush2.bf16.msra.mxu0 0
        %1136 = vmatprep.subr.bf16.mxu0 0
        %1137 = vmatpush2.bf16.msra.mxu0 0
        %1138 = vmatprep.subr.bf16.mxu0 0
        %1139 = vmatpush2.bf16.msra.mxu0 0
        %1140 = vmatprep.subr.bf16.mxu0 0
        %1141 = vmatpush2.bf16.msra.mxu0 0
        %1142 = vmatprep.subr.bf16.mxu0 0
        %1143 = vmatpush2.bf16.msra.mxu0 0
        %1144 = vmatprep.subr.bf16.mxu0 0
        %1145 = vmatpush2.bf16.msra.mxu0 0
        %1146 = vmatprep.subr.bf16.mxu0 0
        %1147 = vmatpush2.bf16.msra.mxu0 0
        %1148 = vmatprep.mubr.bf16.mxu0 0
        %1149 = vmatmul.mubr.bf16.gmra.mxu0 %v710
        %v1150 = vpop.f32.mrf.mxu0
        %v1151 = vadd.f32 0.0, %v1150
        %v1152 = vpop.f32.mrf.mxu0
        %v1153 = vpop.f32.mrf.mxu0
        %v1154 = vadd.f32 0.0, %v1153
        %v1155 = vpop.f32.mrf.mxu0
        %1156 = vmatprep.mubr.bf16.mxu0 0
        %1157 = vmatmul.mubr.bf16.gmra.mxu0 %v713
        %v1158 = vpop.f32.mrf.mxu0
        %v1159 = vadd.f32 0.0, %v1158
        %v1160 = vpop.f32.mrf.mxu0
        %v1161 = vpop.f32.mrf.mxu0
        %v1162 = vadd.f32 0.0, %v1161
        %v1163 = vpop.f32.mrf.mxu0
        %1164 = vmatprep.mubr.bf16.mxu0 0
        %1165 = vmatmul.mubr.bf16.gmra.mxu0 %v716
        %v1166 = vpop.f32.mrf.mxu0
        %v1167 = vadd.f32 0.0, %v1166
        %v1168 = vpop.f32.mrf.mxu0
        %v1169 = vpop.f32.mrf.mxu0
        %v1170 = vadd.f32 0.0, %v1169
        %v1171 = vpop.f32.mrf.mxu0
        %1172 = vmatprep.mubr.bf16.mxu0 0
        %1173 = vmatmul.mubr.bf16.gmra.mxu0 %v719
        %v1174 = vpop.f32.mrf.mxu0
        %v1175 = vadd.f32 0.0, %v1174
        %v1176 = vpop.f32.mrf.mxu0
        %v1177 = vpop.f32.mrf.mxu0
        %v1178 = vadd.f32 0.0, %v1177
        %v1179 = vpop.f32.mrf.mxu0
        %1180 = vmatprep.mubr.bf16.mxu0 0
        %1181 = vmatmul.mubr.bf16.gmra.mxu0 %v722
        %v1182 = vpop.f32.mrf.mxu0
        %v1183 = vadd.f32 0.0, %v1182
        %v1184 = vpop.f32.mrf.mxu0
        %v1185 = vpop.f32.mrf.mxu0
        %v1186 = vadd.f32 0.0, %v1185
        %v1187 = vpop.f32.mrf.mxu0
        %1188 = vmatprep.mubr.bf16.mxu0 0
        %1189 = vmatmul.mubr.bf16.gmra.mxu0 %v725
        %v1190 = vpop.f32.mrf.mxu0
        %v1191 = vadd.f32 0.0, %v1190
        %v1192 = vpop.f32.mrf.mxu0
        %v1193 = vpop.f32.mrf.mxu0
        %v1194 = vadd.f32 0.0, %v1193
        %v1195 = vpop.f32.mrf.mxu0
        %1196 = vmatprep.mubr.bf16.mxu0 0
        %1197 = vmatmul.mubr.bf16.gmra.mxu0 %v728
        %v1198 = vpop.f32.mrf.mxu0
        %v1199 = vadd.f32 0.0, %v1198
        %v1200 = vpop.f32.mrf.mxu0
        %v1201 = vpop.f32.mrf.mxu0
        %v1202 = vadd.f32 0.0, %v1201
        %v1203 = vpop.f32.mrf.mxu0
        %1204 = vmatprep.mubr.bf16.mxu0 0
        %1205 = vmatmul.mubr.bf16.gmra.mxu0 %v1111
        %v1206 = vpop.f32.mrf.mxu0
        %v1207 = vadd.f32 0.0, %v1206
        %v1208 = vpop.f32.mrf.mxu0
        %v1209 = vpop.f32.mrf.mxu0
        %v1210 = vadd.f32 0.0, %v1209
        %v1211 = vpop.f32.mrf.mxu0
        %1212 = vdwg.mxu0
        %v1213 = vadd.f32 %v1084, %v1151
        %v1214 = vadd.f32 %v1085, %v1154
        %v1215 = vadd.f32 %v1086, %v1159
        %v1216 = vadd.f32 %v1087, %v1162
        %v1217 = vadd.f32 %v1088, %v1167
        %v1218 = vadd.f32 %v1089, %v1170
        %v1219 = vadd.f32 %v1090, %v1175
        %v1220 = vadd.f32 %v1091, %v1178
        %v1221 = vadd.f32 %v1092, %v1183
        %v1222 = vadd.f32 %v1093, %v1186
        %v1223 = vadd.f32 %v1094, %v1191
        %v1224 = vadd.f32 %v1095, %v1194
        %v1225 = vadd.f32 %v1096, %v1199
        %v1226 = vadd.f32 %v1097, %v1202
        %v1227 = vadd.f32 %v1098, %v1207
        %v1228 = vadd.f32 %v1099, %v1210
        %v1229 = vpack.c.bf16 %v287, %v286
        %s1230 = scalar_lea.vmem %s219, 12
        %v1231 = vld [vmem:[%s1230] sm:$0x3]
        %v1233 = vsel %vm389, %v1229, 0
        %v1236 = vsel %vm414, %v1231, 0
        %1238 = vmatprep.subr.bf16.mxu0 0
        %1239 = vmatpush1.bf16.msra.mxu0 0
        %1240 = vmatprep.subr.bf16.mxu0 0
        %1241 = vmatpush1.bf16.msra.mxu0 0
        %1242 = vmatprep.subr.bf16.mxu0 0
        %1243 = vmatpush1.bf16.msra.mxu0 0
        %1244 = vmatprep.subr.bf16.mxu0 0
        %1245 = vmatpush1.bf16.msra.mxu0 0
        %1246 = vmatprep.subr.bf16.mxu0 0
        %1247 = vmatpush1.bf16.msra.mxu0 0
        %1248 = vmatprep.subr.bf16.mxu0 0
        %1249 = vmatpush1.bf16.msra.mxu0 0
        %1250 = vmatprep.subr.bf16.mxu0 0
        %1251 = vmatpush1.bf16.msra.mxu0 0
        %1252 = vmatprep.subr.bf16.mxu0 0
        %1253 = vmatpush1.bf16.msra.mxu0 %v1236
        %1254 = vmatprep.subr.bf16.mxu0 0
        %1255 = vmatpush2.bf16.msra.mxu0 0
        %1256 = vmatprep.subr.bf16.mxu0 0
        %1257 = vmatpush2.bf16.msra.mxu0 0
        %1258 = vmatprep.subr.bf16.mxu0 0
        %1259 = vmatpush2.bf16.msra.mxu0 0
        %1260 = vmatprep.subr.bf16.mxu0 0
        %1261 = vmatpush2.bf16.msra.mxu0 0
        %1262 = vmatprep.subr.bf16.mxu0 0
        %1263 = vmatpush2.bf16.msra.mxu0 0
        %1264 = vmatprep.subr.bf16.mxu0 0
        %1265 = vmatpush2.bf16.msra.mxu0 0
        %1266 = vmatprep.subr.bf16.mxu0 0
        %1267 = vmatpush2.bf16.msra.mxu0 0
        %1268 = vmatprep.subr.bf16.mxu0 0
        %1269 = vmatpush2.bf16.msra.mxu0 0
        %1270 = vmatprep.mubr.bf16.mxu0 0
        %1271 = vmatmul.mubr.bf16.gmra.mxu0 %v522
        %v1272 = vpop.f32.mrf.mxu0
        %v1273 = vadd.f32 0.0, %v1272
        %v1274 = vpop.f32.mrf.mxu0
        %v1275 = vpop.f32.mrf.mxu0
        %v1276 = vadd.f32 0.0, %v1275
        %v1277 = vpop.f32.mrf.mxu0
        %1278 = vmatprep.mubr.bf16.mxu0 0
        %1279 = vmatmul.mubr.bf16.gmra.mxu0 %v525
        %v1280 = vpop.f32.mrf.mxu0
        %v1281 = vadd.f32 0.0, %v1280
        %v1282 = vpop.f32.mrf.mxu0
        %v1283 = vpop.f32.mrf.mxu0
        %v1284 = vadd.f32 0.0, %v1283
        %v1285 = vpop.f32.mrf.mxu0
        %1286 = vmatprep.mubr.bf16.mxu0 0
        %1287 = vmatmul.mubr.bf16.gmra.mxu0 %v528
        %v1288 = vpop.f32.mrf.mxu0
        %v1289 = vadd.f32 0.0, %v1288
        %v1290 = vpop.f32.mrf.mxu0
        %v1291 = vpop.f32.mrf.mxu0
        %v1292 = vadd.f32 0.0, %v1291
        %v1293 = vpop.f32.mrf.mxu0
        %1294 = vmatprep.mubr.bf16.mxu0 0
        %1295 = vmatmul.mubr.bf16.gmra.mxu0 %v531
        %v1296 = vpop.f32.mrf.mxu0
        %v1297 = vadd.f32 0.0, %v1296
        %v1298 = vpop.f32.mrf.mxu0
        %v1299 = vpop.f32.mrf.mxu0
        %v1300 = vadd.f32 0.0, %v1299
        %v1301 = vpop.f32.mrf.mxu0
        %1302 = vmatprep.mubr.bf16.mxu0 0
        %1303 = vmatmul.mubr.bf16.gmra.mxu0 %v534
        %v1304 = vpop.f32.mrf.mxu0
        %v1305 = vadd.f32 0.0, %v1304
        %v1306 = vpop.f32.mrf.mxu0
        %v1307 = vpop.f32.mrf.mxu0
        %v1308 = vadd.f32 0.0, %v1307
        %v1309 = vpop.f32.mrf.mxu0
        %1310 = vmatprep.mubr.bf16.mxu0 0
        %1311 = vmatmul.mubr.bf16.gmra.mxu0 %v537
        %v1312 = vpop.f32.mrf.mxu0
        %v1313 = vadd.f32 0.0, %v1312
        %v1314 = vpop.f32.mrf.mxu0
        %v1315 = vpop.f32.mrf.mxu0
        %v1316 = vadd.f32 0.0, %v1315
        %v1317 = vpop.f32.mrf.mxu0
        %1318 = vmatprep.mubr.bf16.mxu0 0
        %1319 = vmatmul.mubr.bf16.gmra.mxu0 %v850
        %v1320 = vpop.f32.mrf.mxu0
        %v1321 = vadd.f32 0.0, %v1320
        %v1322 = vpop.f32.mrf.mxu0
        %v1323 = vpop.f32.mrf.mxu0
        %v1324 = vadd.f32 0.0, %v1323
        %v1325 = vpop.f32.mrf.mxu0
        %1326 = vmatprep.mubr.bf16.mxu0 0
        %1327 = vmatmul.mubr.bf16.gmra.mxu0 %v1233
        %v1328 = vpop.f32.mrf.mxu0
        %v1329 = vadd.f32 0.0, %v1328
        %v1330 = vpop.f32.mrf.mxu0
        %v1331 = vpop.f32.mrf.mxu0
        %v1332 = vadd.f32 0.0, %v1331
        %v1333 = vpop.f32.mrf.mxu0
        %1334 = vdwg.mxu0
        %v1335 = vadd.f32 %v1213, %v1273
        %v1336 = vadd.f32 %v1214, %v1276
        %v1337 = vadd.f32 %v1215, %v1281
        %v1338 = vadd.f32 %v1216, %v1284
        %v1339 = vadd.f32 %v1217, %v1289
        %v1340 = vadd.f32 %v1218, %v1292
        %v1341 = vadd.f32 %v1219, %v1297
        %v1342 = vadd.f32 %v1220, %v1300
        %v1343 = vadd.f32 %v1221, %v1305
        %v1344 = vadd.f32 %v1222, %v1308
        %v1345 = vadd.f32 %v1223, %v1313
        %v1346 = vadd.f32 %v1224, %v1316
        %v1347 = vadd.f32 %v1225, %v1321
        %v1348 = vadd.f32 %v1226, %v1324
        %v1349 = vadd.f32 %v1227, %v1329
        %v1350 = vadd.f32 %v1228, %v1332
        %v1354 = vrot.slane %v286, 1
        %v1355 = vrot.slane %v287, 1
        %v1356 = vsel %vm322, %v1354, %v1355
        %v1357 = vrot.slane %v288, 1
        %v1358 = vsel %vm322, %v1355, %v1357
        %v1361 = vpack.c.bf16 %v1358, %v1356
        %s1362 = scalar_lea.vmem %s219, 14
        %v1363 = vld [vmem:[%s1362] sm:$0x3]
        %v1365 = vsel %vm389, %v1361, 0
        %v1368 = vsel %vm414, %v1363, 0
        %1370 = vmatprep.subr.bf16.mxu0 0
        %1371 = vmatpush1.bf16.msra.mxu0 0
        %1372 = vmatprep.subr.bf16.mxu0 0
        %1373 = vmatpush1.bf16.msra.mxu0 0
        %1374 = vmatprep.subr.bf16.mxu0 0
        %1375 = vmatpush1.bf16.msra.mxu0 0
        %1376 = vmatprep.subr.bf16.mxu0 0
        %1377 = vmatpush1.bf16.msra.mxu0 0
        %1378 = vmatprep.subr.bf16.mxu0 0
        %1379 = vmatpush1.bf16.msra.mxu0 0
        %1380 = vmatprep.subr.bf16.mxu0 0
        %1381 = vmatpush1.bf16.msra.mxu0 0
        %1382 = vmatprep.subr.bf16.mxu0 0
        %1383 = vmatpush1.bf16.msra.mxu0 0
        %1384 = vmatprep.subr.bf16.mxu0 0
        %1385 = vmatpush1.bf16.msra.mxu0 %v1368
        %1386 = vmatprep.subr.bf16.mxu0 0
        %1387 = vmatpush2.bf16.msra.mxu0 0
        %1388 = vmatprep.subr.bf16.mxu0 0
        %1389 = vmatpush2.bf16.msra.mxu0 0
        %1390 = vmatprep.subr.bf16.mxu0 0
        %1391 = vmatpush2.bf16.msra.mxu0 0
        %1392 = vmatprep.subr.bf16.mxu0 0
        %1393 = vmatpush2.bf16.msra.mxu0 0
        %1394 = vmatprep.subr.bf16.mxu0 0
        %1395 = vmatpush2.bf16.msra.mxu0 0
        %1396 = vmatprep.subr.bf16.mxu0 0
        %1397 = vmatpush2.bf16.msra.mxu0 0
        %1398 = vmatprep.subr.bf16.mxu0 0
        %1399 = vmatpush2.bf16.msra.mxu0 0
        %1400 = vmatprep.subr.bf16.mxu0 0
        %1401 = vmatpush2.bf16.msra.mxu0 0
        %1402 = vmatprep.mubr.bf16.mxu0 0
        %1403 = vmatmul.mubr.bf16.gmra.mxu0 %v397
        %v1404 = vpop.f32.mrf.mxu0
        %v1405 = vadd.f32 0.0, %v1404
        %v1406 = vpop.f32.mrf.mxu0
        %v1407 = vpop.f32.mrf.mxu0
        %v1408 = vadd.f32 0.0, %v1407
        %v1409 = vpop.f32.mrf.mxu0
        %1410 = vmatprep.mubr.bf16.mxu0 0
        %1411 = vmatmul.mubr.bf16.gmra.mxu0 %v400
        %v1412 = vpop.f32.mrf.mxu0
        %v1413 = vadd.f32 0.0, %v1412
        %v1414 = vpop.f32.mrf.mxu0
        %v1415 = vpop.f32.mrf.mxu0
        %v1416 = vadd.f32 0.0, %v1415
        %v1417 = vpop.f32.mrf.mxu0
        %1418 = vmatprep.mubr.bf16.mxu0 0
        %1419 = vmatmul.mubr.bf16.gmra.mxu0 %v403
        %v1420 = vpop.f32.mrf.mxu0
        %v1421 = vadd.f32 0.0, %v1420
        %v1422 = vpop.f32.mrf.mxu0
        %v1423 = vpop.f32.mrf.mxu0
        %v1424 = vadd.f32 0.0, %v1423
        %v1425 = vpop.f32.mrf.mxu0
        %1426 = vmatprep.mubr.bf16.mxu0 0
        %1427 = vmatmul.mubr.bf16.gmra.mxu0 %v406
        %v1428 = vpop.f32.mrf.mxu0
        %v1429 = vadd.f32 0.0, %v1428
        %v1430 = vpop.f32.mrf.mxu0
        %v1431 = vpop.f32.mrf.mxu0
        %v1432 = vadd.f32 0.0, %v1431
        %v1433 = vpop.f32.mrf.mxu0
        %1434 = vmatprep.mubr.bf16.mxu0 0
        %1435 = vmatmul.mubr.bf16.gmra.mxu0 %v409
        %v1436 = vpop.f32.mrf.mxu0
        %v1437 = vadd.f32 0.0, %v1436
        %v1438 = vpop.f32.mrf.mxu0
        %v1439 = vpop.f32.mrf.mxu0
        %v1440 = vadd.f32 0.0, %v1439
        %v1441 = vpop.f32.mrf.mxu0
        %1442 = vmatprep.mubr.bf16.mxu0 0
        %1443 = vmatmul.mubr.bf16.gmra.mxu0 %v412
        %v1444 = vpop.f32.mrf.mxu0
        %v1445 = vadd.f32 0.0, %v1444
        %v1446 = vpop.f32.mrf.mxu0
        %v1447 = vpop.f32.mrf.mxu0
        %v1448 = vadd.f32 0.0, %v1447
        %v1449 = vpop.f32.mrf.mxu0
        %1450 = vmatprep.mubr.bf16.mxu0 0
        %1451 = vmatmul.mubr.bf16.gmra.mxu0 %v982
        %v1452 = vpop.f32.mrf.mxu0
        %v1453 = vadd.f32 0.0, %v1452
        %v1454 = vpop.f32.mrf.mxu0
        %v1455 = vpop.f32.mrf.mxu0
        %v1456 = vadd.f32 0.0, %v1455
        %v1457 = vpop.f32.mrf.mxu0
        %1458 = vmatprep.mubr.bf16.mxu0 0
        %1459 = vmatmul.mubr.bf16.gmra.mxu0 %v1365
        %v1460 = vpop.f32.mrf.mxu0
        %v1461 = vadd.f32 0.0, %v1460
        %v1462 = vpop.f32.mrf.mxu0
        %v1463 = vpop.f32.mrf.mxu0
        %v1464 = vadd.f32 0.0, %v1463
        %v1465 = vpop.f32.mrf.mxu0
        %1466 = vdwg.mxu0
        %v1467 = vadd.f32 %v1335, %v1405
        %v1468 = vadd.f32 %v1336, %v1408
        %v1469 = vadd.f32 %v1337, %v1413
        %v1470 = vadd.f32 %v1338, %v1416
        %v1471 = vadd.f32 %v1339, %v1421
        %v1472 = vadd.f32 %v1340, %v1424
        %v1473 = vadd.f32 %v1341, %v1429
        %v1474 = vadd.f32 %v1342, %v1432
        %v1475 = vadd.f32 %v1343, %v1437
        %v1476 = vadd.f32 %v1344, %v1440
        %v1477 = vadd.f32 %v1345, %v1445
        %v1478 = vadd.f32 %v1346, %v1448
        %v1479 = vadd.f32 %v1347, %v1453
        %v1480 = vadd.f32 %v1348, %v1456
        %v1481 = vadd.f32 %v1349, %v1461
        %v1482 = vadd.f32 %v1350, %v1464
        %v1483 = vrot.slane %v286, 2
        %v1484 = vrot.slane %v287, 2
        %v1485 = vsel %vm639, %v1483, %v1484
        %v1486 = vrot.slane %v288, 2
        %v1487 = vsel %vm639, %v1484, %v1486
        %v1490 = vpack.c.bf16 %v1487, %v1485
        %s1491 = scalar_lea.vmem %s219, 16
        %v1492 = vld [vmem:[%s1491] sm:$0x3]
        %v1494 = vsel %vm389, %v1490, 0
        %v1497 = vsel %vm414, %v1492, 0
        %1499 = vmatprep.subr.bf16.mxu0 0
        %1500 = vmatpush1.bf16.msra.mxu0 0
        %1501 = vmatprep.subr.bf16.mxu0 0
        %1502 = vmatpush1.bf16.msra.mxu0 0
        %1503 = vmatprep.subr.bf16.mxu0 0
        %1504 = vmatpush1.bf16.msra.mxu0 0
        %1505 = vmatprep.subr.bf16.mxu0 0
        %1506 = vmatpush1.bf16.msra.mxu0 0
        %1507 = vmatprep.subr.bf16.mxu0 0
        %1508 = vmatpush1.bf16.msra.mxu0 0
        %1509 = vmatprep.subr.bf16.mxu0 0
        %1510 = vmatpush1.bf16.msra.mxu0 0
        %1511 = vmatprep.subr.bf16.mxu0 0
        %1512 = vmatpush1.bf16.msra.mxu0 0
        %1513 = vmatprep.subr.bf16.mxu0 0
        %1514 = vmatpush1.bf16.msra.mxu0 %v1497
        %1515 = vmatprep.subr.bf16.mxu0 0
        %1516 = vmatpush2.bf16.msra.mxu0 0
        %1517 = vmatprep.subr.bf16.mxu0 0
        %1518 = vmatpush2.bf16.msra.mxu0 0
        %1519 = vmatprep.subr.bf16.mxu0 0
        %1520 = vmatpush2.bf16.msra.mxu0 0
        %1521 = vmatprep.subr.bf16.mxu0 0
        %1522 = vmatpush2.bf16.msra.mxu0 0
        %1523 = vmatprep.subr.bf16.mxu0 0
        %1524 = vmatpush2.bf16.msra.mxu0 0
        %1525 = vmatprep.subr.bf16.mxu0 0
        %1526 = vmatpush2.bf16.msra.mxu0 0
        %1527 = vmatprep.subr.bf16.mxu0 0
        %1528 = vmatpush2.bf16.msra.mxu0 0
        %1529 = vmatprep.subr.bf16.mxu0 0
        %1530 = vmatpush2.bf16.msra.mxu0 0
        %1531 = vmatprep.mubr.bf16.mxu0 0
        %1532 = vmatmul.mubr.bf16.gmra.mxu0 %v713
        %v1533 = vpop.f32.mrf.mxu0
        %v1534 = vadd.f32 0.0, %v1533
        %v1535 = vpop.f32.mrf.mxu0
        %v1536 = vpop.f32.mrf.mxu0
        %v1537 = vadd.f32 0.0, %v1536
        %v1538 = vpop.f32.mrf.mxu0
        %1539 = vmatprep.mubr.bf16.mxu0 0
        %1540 = vmatmul.mubr.bf16.gmra.mxu0 %v716
        %v1541 = vpop.f32.mrf.mxu0
        %v1542 = vadd.f32 0.0, %v1541
        %v1543 = vpop.f32.mrf.mxu0
        %v1544 = vpop.f32.mrf.mxu0
        %v1545 = vadd.f32 0.0, %v1544
        %v1546 = vpop.f32.mrf.mxu0
        %1547 = vmatprep.mubr.bf16.mxu0 0
        %1548 = vmatmul.mubr.bf16.gmra.mxu0 %v719
        %v1549 = vpop.f32.mrf.mxu0
        %v1550 = vadd.f32 0.0, %v1549
        %v1551 = vpop.f32.mrf.mxu0
        %v1552 = vpop.f32.mrf.mxu0
        %v1553 = vadd.f32 0.0, %v1552
        %v1554 = vpop.f32.mrf.mxu0
        %1555 = vmatprep.mubr.bf16.mxu0 0
        %1556 = vmatmul.mubr.bf16.gmra.mxu0 %v722
        %v1557 = vpop.f32.mrf.mxu0
        %v1558 = vadd.f32 0.0, %v1557
        %v1559 = vpop.f32.mrf.mxu0
        %v1560 = vpop.f32.mrf.mxu0
        %v1561 = vadd.f32 0.0, %v1560
        %v1562 = vpop.f32.mrf.mxu0
        %1563 = vmatprep.mubr.bf16.mxu0 0
        %1564 = vmatmul.mubr.bf16.gmra.mxu0 %v725
        %v1565 = vpop.f32.mrf.mxu0
        %v1566 = vadd.f32 0.0, %v1565
        %v1567 = vpop.f32.mrf.mxu0
        %v1568 = vpop.f32.mrf.mxu0
        %v1569 = vadd.f32 0.0, %v1568
        %v1570 = vpop.f32.mrf.mxu0
        %1571 = vmatprep.mubr.bf16.mxu0 0
        %1572 = vmatmul.mubr.bf16.gmra.mxu0 %v728
        %v1573 = vpop.f32.mrf.mxu0
        %v1574 = vadd.f32 0.0, %v1573
        %v1575 = vpop.f32.mrf.mxu0
        %v1576 = vpop.f32.mrf.mxu0
        %v1577 = vadd.f32 0.0, %v1576
        %v1578 = vpop.f32.mrf.mxu0
        %1579 = vmatprep.mubr.bf16.mxu0 0
        %1580 = vmatmul.mubr.bf16.gmra.mxu0 %v1111
        %v1581 = vpop.f32.mrf.mxu0
        %v1582 = vadd.f32 0.0, %v1581
        %v1583 = vpop.f32.mrf.mxu0
        %v1584 = vpop.f32.mrf.mxu0
        %v1585 = vadd.f32 0.0, %v1584
        %v1586 = vpop.f32.mrf.mxu0
        %1587 = vmatprep.mubr.bf16.mxu0 0
        %1588 = vmatmul.mubr.bf16.gmra.mxu0 %v1494
        %v1589 = vpop.f32.mrf.mxu0
        %v1590 = vadd.f32 0.0, %v1589
        %v1591 = vpop.f32.mrf.mxu0
        %v1592 = vpop.f32.mrf.mxu0
        %v1593 = vadd.f32 0.0, %v1592
        %v1594 = vpop.f32.mrf.mxu0
        %1595 = vdwg.mxu0
        %v1596 = vadd.f32 %v1467, %v1534
        %v1597 = vadd.f32 %v1468, %v1537
        %v1598 = vadd.f32 %v1469, %v1542
        %v1599 = vadd.f32 %v1470, %v1545
        %v1600 = vadd.f32 %v1471, %v1550
        %v1601 = vadd.f32 %v1472, %v1553
        %v1602 = vadd.f32 %v1473, %v1558
        %v1603 = vadd.f32 %v1474, %v1561
        %v1604 = vadd.f32 %v1475, %v1566
        %v1605 = vadd.f32 %v1476, %v1569
        %v1606 = vadd.f32 %v1477, %v1574
        %v1607 = vadd.f32 %v1478, %v1577
        %v1608 = vadd.f32 %v1479, %v1582
        %v1609 = vadd.f32 %v1480, %v1585
        %v1610 = vadd.f32 %v1481, %v1590
        %v1611 = vadd.f32 %v1482, %v1593
        %v1612 = vld [vmem:[%s222] sm:$0x1]
        %v1614 = vlaneseq
        %v1615 = vshrl.u32 %v1614, 7
        %v1616 = vsub.s32 0, %v1615
        %v1617 = vrot.slane %v1612, %v1616
        %v1619 = vadd.f32 %v1596, %v1617
        %v1620 = vadd.f32 %v1597, %v1617
        %v1621 = vadd.f32 %v1598, %v1617
        %v1622 = vadd.f32 %v1599, %v1617
        %v1623 = vadd.f32 %v1600, %v1617
        %v1624 = vadd.f32 %v1601, %v1617
        %v1625 = vadd.f32 %v1602, %v1617
        %v1626 = vadd.f32 %v1603, %v1617
        %v1627 = vadd.f32 %v1604, %v1617
        %v1628 = vadd.f32 %v1605, %v1617
        %v1629 = vadd.f32 %v1606, %v1617
        %v1630 = vadd.f32 %v1607, %v1617
        %v1631 = vadd.f32 %v1608, %v1617
        %v1632 = vadd.f32 %v1609, %v1617
        %v1633 = vadd.f32 %v1610, %v1617
        %v1634 = vadd.f32 %v1611, %v1617
        %1635 = vst [vmem:[%s210] sm:$0xff] %v1619
        %1636 = vst [vmem:[%s210 + $0x8] sm:$0xff] %v1620
        %1637 = vst [vmem:[%s210 + $0x10] sm:$0xff] %v1621
        %1638 = vst [vmem:[%s210 + $0x18] sm:$0xff] %v1622
        %1639 = vst [vmem:[%s210 + $0x20] sm:$0xff] %v1623
        %1640 = vst [vmem:[%s210 + $0x28] sm:$0xff] %v1624
        %1641 = vst [vmem:[%s210 + $0x30] sm:$0xff] %v1625
        %1642 = vst [vmem:[%s210 + $0x38] sm:$0xff] %v1626
        %1643 = vst [vmem:[%s210 + $0x40] sm:$0xff] %v1627
        %1644 = vst [vmem:[%s210 + $0x48] sm:$0xff] %v1628
        %1645 = vst [vmem:[%s210 + $0x50] sm:$0xff] %v1629
        %1646 = vst [vmem:[%s210 + $0x58] sm:$0xff] %v1630
        %1647 = vst [vmem:[%s210 + $0x60] sm:$0xff] %v1631
        %1648 = vst [vmem:[%s210 + $0x68] sm:$0xff] %v1632
        %1649 = vst [vmem:[%s210 + $0x70] sm:$0xff] %v1633
        %1650 = vst [vmem:[%s210 + $0x78] sm:$0xff] %v1634
        %s1651 = sand.u32 %s126, 1
        %s1652 = scalar_lea.sflag [#allocation3], %s1651
        %s1653 = sand.u32 %s126, 1
        %s1654 = smul.addr %s1653, 128
        %s1655 = scalar_lea.vmem [#allocation2], %s1654
        // Predicated region
        $region33: #{tpu_custom_call.1} parent=31 // pred_check
          %p1656 = pneg %p136
        $region34: #{tpu_custom_call.1} parent=31 // pred_check_branch
          %1658 = sbr.rel (%p1656) target = $region36
        $region35: #{tpu_custom_call.1} parent=31 // pred_region
          %s1659 = smul.u32 8, %s23
          %s1661 = ssub.s32 2048, 2048
          %1662 = vsyncadd %s1652, %s1661
          %s1663 = smul.addr %s1659, 2
          %s1664 = sadd.s32 %s24, %s1663
          %s1665 = smul.addr %s22, 32
          %s1666 = sadd.s32 %s1664, %s1665
          %s1667 = smul.addr %s1666, 128
          %s1668 = scalar_lea.hbm %s3, %s1667
          %s1669 = sshll.u32 %s1655, 4
          %s1670 = int_to_ptr.vmem [resolvable:$true] %s1669
          %1675 = dma.vmem_to_hbm [thread:$0]  %s1670, 2048, %s1668, %s1652, 128, 128, 8
        $region36: #{tpu_custom_call.1} parent=31 // pred_fallthru
          _
      $region32: #{tpu_custom_call.1} parent=5 // pred_fallthru
        _
      %p1676 = scmp.le.s32.totalorder 2, %s12
      // Predicated region
      $region37: #{tpu_custom_call.1} parent=5 // pred_check
        %p1677 = pneg %p1676
      $region38: #{tpu_custom_call.1} parent=5 // pred_check_branch
        %1679 = sbr.rel (%p1677) target = $region40
      $region39: #{tpu_custom_call.1} parent=5 // pred_region
        %s1680 = ssub.s32 %s12, 2
        // Predicated region
        $region41: #{tpu_custom_call.1} parent=39 // pred_check
          %p1681 = pneg %p142
        $region42: #{tpu_custom_call.1} parent=39 // pred_check_branch
          %1683 = sbr.rel (%p1681) target = $region44
        $region43: #{tpu_custom_call.1} parent=39 // pred_region
          %s1684 = sand.u32 %s127, 1
          %s1685 = scalar_lea.sflag [#allocation3], %s1684
          %s1686 = sand.u32 %s127, 1
          %s1687 = smul.addr %s1686, 128
          %s1688 = scalar_lea.vmem [#allocation2], %s1687
          %1689 = dma.done %s1685, 2048
        $region44: #{tpu_custom_call.1} parent=39 // pred_fallthru
          _
      $region40: #{tpu_custom_call.1} parent=5 // pred_fallthru
        _
    $region6: #{tpu_custom_call.1} parent=1 // loop_footer
      %s16 = sadd.s32 1, %s12
    $region7: #{tpu_custom_call.1} parent=1 // loop_footer_branch
      %11 = sbr.rel target = $region3
    $region8: #{tpu_custom_call.1} parent=1 // loop_exit
      _
    %1690 = vsyncpa [#allocation3], 1
    %s1691 = scalar_lea.sflag [#allocation3], 1
    %1692 = vsyncpa %s1691, 1

</llo_original>
